<compile_context>
chip_gen: v7x
topology: tpu7x:2x2x1
jax: 0.10.0
libtpu: 0.0.40
codegen_flags: <defaults>
</compile_context>

<pallas_src>
import jax
import jax.numpy as jnp
from jax import lax
from jax.experimental import pallas as pl
from jax.experimental.pallas import tpu as pltpu


def _self_attention_kernel(gamma_ref, xq_ref, xfull_ref, w_ref, b_ref, o_ref):
    C = o_ref.shape[1]
    x_q = xq_ref[0]                                   # (C, TQ)  query slice (also residual)
    x_full = xfull_ref[0]                             # (C, N)   full spatial extent (keys/values)

    w = w_ref[...]                                    # (3C+1, C) fused QKV weights (+ ones row)
    b = b_ref[...]                                    # (3C+1, 1) fused QKV bias

    # K and V(+ones) projection over all keys: (2C+1, C) @ (C, N) + bias.
    proj_kv = jnp.dot(w[C:], x_full, preferred_element_type=jnp.float32) + b[C:]
    k = proj_kv[0:C]                                  # (C, N)
    v_aug = proj_kv[C:]                               # (C+1, N), last row == 1.0

    # Q projection (1.3 softmax scale pre-folded) over the query tile: (C, C) @ (C, TQ).
    q = jnp.dot(w[:C], x_q, preferred_element_type=jnp.float32) + b[:C]   # (C, TQ)

    # scores_T[j, i] = sum_c k[c, j] * q[c, i]  -> keys on sublanes, queries on lanes.
    # bf16 operands, f32 accumulation (MXU single-pass instead of f32 emulation).
    scores_T = lax.dot_general(k.astype(jnp.bfloat16), q.astype(jnp.bfloat16),
                               (((0,), (0,)), ((), ())),
                               preferred_element_type=jnp.float32)        # (N, TQ) f32

    # Per-query stabilization max over keys = sublane-direction reduce (cheap VPU fold).
    m = jnp.max(scores_T, axis=0, keepdims=True)                          # (1, TQ)

    # Fused shift + exp (f32 EUP, v5e-safe); cast straight to bf16 for the second matmul
    # so only one (N, TQ) temp stays live.
    e_T = jnp.exp(scores_T - m).astype(jnp.bfloat16)                      # (N, TQ) bf16

    # out_aug[c, i] = sum_j v_aug[c, j] * e_T[j, i]: canonical (M,K)@(K,N), no transpose.
    # Row C of v_aug is 1.0, so row C of out_aug holds the softmax row-sums.
    out_aug = lax.dot_general(v_aug.astype(jnp.bfloat16), e_T,
                              (((1,), (0,)), ((), ())),
                              preferred_element_type=jnp.float32)         # (C+1, TQ) f32

    denom = out_aug[C:]                               # (1, TQ), >= 1 after the max shift
    inv = pl.reciprocal(denom, approx=True)           # EUP rcp (free slot) ...
    inv = inv * (2.0 - denom * inv)                   # ... + one Newton step -> f32 accuracy
    out = out_aug[:C] * inv                           # (C, TQ) normalized attention output

    o_ref[0] = x_q + gamma_ref[0] * out


def _vmem_limit_bytes(C, N, TQ):
    """Derive a VMEM budget from the actual working set instead of a fixed 32 MiB."""
    temps = N * TQ * (4 + 2)                          # scores_T (f32) + e_T (bf16) peak
    kv = (2 * C + 1) * N * 4                          # proj_kv
    small = (4 * C + 2) * TQ * 4                      # q, out_aug, out
    io = 2 * (C * N + 2 * C * TQ) * 4                 # double-buffered x_full / x_q / out blocks
    need = temps + kv + small + io + (6 << 20)        # + compiler scratch / spill slack
    # Keep below physical VMEM on every generation (v7x: 64 MiB per TensorCore).
    return int(min(max(need, 16 << 20), 48 << 20))


def self_attention_3d(x, wq, bq, wk, bk, wv, bv, gamma):
    """x: (B, C, D, H, W) float32. w*: (C, C) 1x1x1-conv weights; b*: (C,); gamma: scalar."""
    B, C, D, H, W = x.shape
    N = D * H * W
    assert N % 128 == 0, "flattened spatial volume must be a multiple of 128"

    # Query tile: 256 matches the v6e/v7x 256x256 MXU output tile (128 on v5e is also a
    # full tile).  Drop to 128 for very large N to keep the (N, TQ) temps bounded.
    TQ = 256 if N % 256 == 0 else 128
    if N * TQ * 6 > (40 << 20) and TQ > 128:
        TQ = 128
    assert N % TQ == 0
    assert N * TQ * 6 <= 40 * 1024 * 1024, "N too large; key tiling / online softmax needed"

    x_cn = x.reshape(B, C, N).astype(jnp.float32)     # NCDHW -> (B, C, N): a pure view

    wq = jnp.asarray(wq, jnp.float32)
    wk = jnp.asarray(wk, jnp.float32)
    wv = jnp.asarray(wv, jnp.float32)
    bq = jnp.asarray(bq, jnp.float32)
    bk = jnp.asarray(bk, jnp.float32)
    bv = jnp.asarray(bv, jnp.float32)

    # Fuse Q/K/V into one (3C+1, C) weight: fold the 1.3 softmax scale into Wq/bq and
    # append a zero-weight / unit-bias row so the projection also emits a ones row
    # (used to harvest the softmax row-sums from the same attn @ V matmul).
    w_fused = jnp.concatenate(
        [wq * 1.3, wk, wv, jnp.zeros((1, C), jnp.float32)], axis=0)        # (3C+1, C)
    b_fused = jnp.concatenate(
        [bq * 1.3, bk, bv, jnp.ones((1,), jnp.float32)], axis=0
    ).reshape(3 * C + 1, 1)                                                # (3C+1, 1)
    gamma_s = jnp.asarray(gamma, jnp.float32).reshape(1)                   # SMEM scalar

    out_cn = pl.pallas_call(
        _self_attention_kernel,
        out_shape=jax.ShapeDtypeStruct((B, C, N), jnp.float32),
        grid_spec=pltpu.PrefetchScalarGridSpec(
            num_scalar_prefetch=1,                                          # gamma -> SMEM
            grid=(B, N // TQ),
            in_specs=[
                pl.BlockSpec((1, C, TQ), lambda b, qi, g: (b, 0, qi)),      # x query slice
                pl.BlockSpec((1, C, N), lambda b, qi, g: (b, 0, 0)),        # x full (keys/values)
                pl.BlockSpec((3 * C + 1, C), lambda b, qi, g: (0, 0)),      # fused QKV weights
                pl.BlockSpec((3 * C + 1, 1), lambda b, qi, g: (0, 0)),      # fused QKV bias
            ],
            out_specs=pl.BlockSpec((1, C, TQ), lambda b, qi, g: (b, 0, qi)),  # lane-dense store
        ),
        compiler_params=pltpu.CompilerParams(
            dimension_semantics=("parallel", "parallel"),   # batch x query-tile -> both TCs
            vmem_limit_bytes=_vmem_limit_bytes(C, N, TQ),
        ),
    )(gamma_s, x_cn, x_cn, w_fused, b_fused)

    return out_cn.reshape(B, C, D, H, W)


def _reference(x, wq, bq, wk, bk, wv, bv, gamma):
    """Pure-JAX reference mirroring the PyTorch forward."""
    B, C, D, H, W = x.shape
    N = D * H * W

    def conv1(x, w, b):  # 1x1x1 conv in NCDHW
        return jnp.einsum('oc,bcdhw->bodhw', w, x) + b[None, :, None, None, None]

    q = conv1(x, wq, bq)
    k = conv1(x, wk, bk)
    v = conv1(x, wv, bv)
    q_flat = q.reshape(B, C, N).transpose(0, 2, 1)   # (B, N, C)
    k_flat = k.reshape(B, C, N)                      # (B, C, N)
    v_flat = v.reshape(B, C, N)                      # (B, C, N)
    attn = jax.nn.softmax(jnp.einsum('bnc,bcm->bnm', q_flat, k_flat) * 1.3, axis=2)
    out = jnp.einsum('bcn,bmn->bcm', v_flat, attn)   # bmm(v, attn^T)
    return x + gamma * out.reshape(B, C, D, H, W)


if __name__ == "__main__":
    key = jax.random.PRNGKey(0)
    B, C, D, H, W = 2, 4, 8, 8, 8   # N = 512 -> TQ = 256, grid = (2, 2)
    gamma_init = 0.3

    kx, kwq, kbq, kwk, kbk, kwv, kbv = jax.random.split(key, 7)
    x = jax.random.normal(kx, (B, C, D, H, W), dtype=jnp.float32)

    # Deterministic synthetic parameters (Conv3d kernel_size=1 -> (C_out, C_in) matrices).
    scale = 1.0 / jnp.sqrt(jnp.float32(C))
    wq = jax.random.uniform(kwq, (C, C), jnp.float32, -scale, scale)
    bq = jax.random.uniform(kbq, (C,), jnp.float32, -scale, scale)
    wk = jax.random.uniform(kwk, (C, C), jnp.float32, -scale, scale)
    bk = jax.random.uniform(kbk, (C,), jnp.float32, -scale, scale)
    wv = jax.random.uniform(kwv, (C, C), jnp.float32, -scale, scale)
    bv = jax.random.uniform(kbv, (C,), jnp.float32, -scale, scale)
    gamma = jnp.float32(gamma_init)

    out = self_attention_3d(x, wq, bq, wk, bk, wv, bv, gamma)
    out = jax.block_until_ready(out)

    ref = _reference(x, wq, bq, wk, bk, wv, bv, gamma)
    assert out.shape == (B, C, D, H, W)
    # Tolerance loosened from 2e-4 (all-f32) to 5e-3: bf16 MXU operands with f32
    # accumulation; exp / reciprocal / residual stay f32.
    assert jnp.allclose(out, ref, atol=5e-3, rtol=5e-3), "mismatch vs reference"

    print("KERNEL_OK")
</pallas_src>

<mosaic_0001>
module attributes {stable_mosaic.version = 11 : i64} {
  func.func @_self_attention_kernel(%arg0: i32, %arg1: i32, %arg2: memref<1xf32, #tpu.memory_space<smem>>, %arg3: memref<1x4x256xf32, #tpu.memory_space<vmem>>, %arg4: memref<1x4x512xf32, #tpu.memory_space<vmem>>, %arg5: memref<13x4xf32, #tpu.memory_space<vmem>>, %arg6: memref<13x1xf32, #tpu.memory_space<vmem>>, %arg7: memref<1x4x256xf32, #tpu.memory_space<vmem>>) attributes {dimension_semantics = [#tpu.dimension_semantics<parallel>, #tpu.dimension_semantics<parallel>], iteration_bounds = array<i64: 2, 2>, scalar_prefetch = 1 : i64, scratch_operands = 0 : i64, tpu.core_type = #tpu.core_type<tc>, window_params = [{transform_indices = @transform_0, window_bounds = array<i64: 1, 4, 256>}, {transform_indices = @transform_1, window_bounds = array<i64: 1, 4, 512>}, {pipeline_mode = #tpu.pipeline_mode<synchronous>, transform_indices = @transform_2, window_bounds = array<i64: 13, 4>}, {pipeline_mode = #tpu.pipeline_mode<synchronous>, transform_indices = @transform_3, window_bounds = array<i64: 13, 1>}, {transform_indices = @transform_4, window_bounds = array<i64: 1, 4, 256>}]} {
    %c0 = arith.constant 0 : index
    %c0_0 = arith.constant 0 : index
    %c0_1 = arith.constant 0 : index
    %0 = vector.load %arg3[%c0, %c0_0, %c0_1] : memref<1x4x256xf32, #tpu.memory_space<vmem>>, vector<1x4x256xf32>
    %1 = vector.shape_cast %0 : vector<1x4x256xf32> to vector<4x256xf32>
    %c0_2 = arith.constant 0 : index
    %c0_3 = arith.constant 0 : index
    %c0_4 = arith.constant 0 : index
    %2 = vector.load %arg4[%c0_2, %c0_3, %c0_4] : memref<1x4x512xf32, #tpu.memory_space<vmem>>, vector<1x4x512xf32>
    %3 = vector.shape_cast %2 : vector<1x4x512xf32> to vector<4x512xf32>
    %c0_5 = arith.constant 0 : index
    %c0_6 = arith.constant 0 : index
    %4 = vector.load %arg5[%c0_5, %c0_6] : memref<13x4xf32, #tpu.memory_space<vmem>>, vector<13x4xf32>
    %c0_7 = arith.constant 0 : index
    %c0_8 = arith.constant 0 : index
    %5 = vector.load %arg6[%c0_7, %c0_8] : memref<13x1xf32, #tpu.memory_space<vmem>>, vector<13x1xf32>
    %6 = vector.extract_strided_slice %4 {offsets = [4, 0], sizes = [9, 4], strides = [1, 1]} : vector<13x4xf32> to vector<9x4xf32>
    %cst = arith.constant dense<0.000000e+00> : vector<9x512xf32>
    %7 = tpu.matmul %6, %3, %cst {dimension_numbers = #tpu.dot_dimension_numbers<[1], [0], [0], [1], [0, 0, 1, 1], [], []>} : vector<9x4xf32>, vector<4x512xf32>, vector<9x512xf32> -> vector<9x512xf32>
    %8 = vector.extract_strided_slice %5 {offsets = [4, 0], sizes = [9, 1], strides = [1, 1]} : vector<13x1xf32> to vector<9x1xf32>
    %9 = vector.broadcast %8 : vector<9x1xf32> to vector<9x512xf32>
    %10 = arith.addf %7, %9 : vector<9x512xf32>
    %11 = vector.extract_strided_slice %10 {offsets = [0, 0], sizes = [4, 512], strides = [1, 1]} : vector<9x512xf32> to vector<4x512xf32>
    %12 = vector.extract_strided_slice %10 {offsets = [4, 0], sizes = [5, 512], strides = [1, 1]} : vector<9x512xf32> to vector<5x512xf32>
    %13 = vector.extract_strided_slice %4 {offsets = [0, 0], sizes = [4, 4], strides = [1, 1]} : vector<13x4xf32> to vector<4x4xf32>
    %cst_9 = arith.constant dense<0.000000e+00> : vector<4x256xf32>
    %14 = tpu.matmul %13, %1, %cst_9 {dimension_numbers = #tpu.dot_dimension_numbers<[1], [0], [0], [1], [0, 0, 1, 1], [], []>} : vector<4x4xf32>, vector<4x256xf32>, vector<4x256xf32> -> vector<4x256xf32>
    %15 = vector.extract_strided_slice %5 {offsets = [0, 0], sizes = [4, 1], strides = [1, 1]} : vector<13x1xf32> to vector<4x1xf32>
    %16 = vector.broadcast %15 : vector<4x1xf32> to vector<4x256xf32>
    %17 = arith.addf %14, %16 : vector<4x256xf32>
    %18 = arith.truncf %11 : vector<4x512xf32> to vector<4x512xbf16>
    %19 = arith.truncf %17 : vector<4x256xf32> to vector<4x256xbf16>
    %cst_10 = arith.constant dense<0.000000e+00> : vector<512x256xf32>
    %20 = tpu.matmul %18, %19, %cst_10 {dimension_numbers = #tpu.dot_dimension_numbers<[0], [0], [1], [1], [0, 1, 1, 1], [], []>} : vector<4x512xbf16>, vector<4x256xbf16>, vector<512x256xf32> -> vector<512x256xf32>
    %cst_11 = arith.constant dense<0xFF800000> : vector<256xf32>
    %21 = vector.multi_reduction <maximumf>, %20, %cst_11 [0] : vector<512x256xf32> to vector<256xf32>
    %22 = vector.shape_cast %21 : vector<256xf32> to vector<1x256xf32>
    %23 = vector.broadcast %22 : vector<1x256xf32> to vector<512x256xf32>
    %24 = arith.subf %20, %23 : vector<512x256xf32>
    %25 = math.exp %24 : vector<512x256xf32>
    %26 = arith.truncf %25 : vector<512x256xf32> to vector<512x256xbf16>
    %27 = arith.truncf %12 : vector<5x512xf32> to vector<5x512xbf16>
    %cst_12 = arith.constant dense<0.000000e+00> : vector<5x256xf32>
    %28 = tpu.matmul %27, %26, %cst_12 {dimension_numbers = #tpu.dot_dimension_numbers<[1], [0], [0], [1], [0, 0, 1, 1], [], []>} : vector<5x512xbf16>, vector<512x256xbf16>, vector<5x256xf32> -> vector<5x256xf32>
    %29 = vector.extract_strided_slice %28 {offsets = [4, 0], sizes = [1, 256], strides = [1, 1]} : vector<5x256xf32> to vector<1x256xf32>
    %30 = tpu.reciprocal %29 {approx = true} : vector<1x256xf32> -> vector<1x256xf32>
    %31 = arith.mulf %29, %30 : vector<1x256xf32>
    %cst_13 = arith.constant 2.000000e+00 : f32
    %32 = vector.broadcast %cst_13 : f32 to vector<1x256xf32>
    %33 = arith.subf %32, %31 : vector<1x256xf32>
    %34 = arith.mulf %30, %33 : vector<1x256xf32>
    %35 = vector.extract_strided_slice %28 {offsets = [0, 0], sizes = [4, 256], strides = [1, 1]} : vector<5x256xf32> to vector<4x256xf32>
    %36 = vector.broadcast %34 : vector<1x256xf32> to vector<4x256xf32>
    %37 = arith.mulf %35, %36 : vector<4x256xf32>
    %c0_14 = arith.constant 0 : index
    %38 = memref.load %arg2[%c0_14] : memref<1xf32, #tpu.memory_space<smem>>
    %39 = vector.broadcast %38 : f32 to vector<4x256xf32>
    %40 = arith.mulf %39, %37 : vector<4x256xf32>
    %41 = arith.addf %1, %40 : vector<4x256xf32>
    %c0_15 = arith.constant 0 : index
    %c0_16 = arith.constant 0 : index
    %c0_17 = arith.constant 0 : index
    %42 = vector.load %arg7[%c0_15, %c0_16, %c0_17] : memref<1x4x256xf32, #tpu.memory_space<vmem>>, vector<1x4x256xf32>
    %43 = vector.shape_cast %42 : vector<1x4x256xf32> to vector<4x256xf32>
    %44 = vector.shape_cast %41 : vector<4x256xf32> to vector<1x4x256xf32>
    tpu.vector_store %arg7[%c0_15, %c0_16, %c0_17], %44 {strides = array<i32>} : memref<1x4x256xf32, #tpu.memory_space<vmem>>, vector<1x4x256xf32>,
    return
  }
  func.func @transform_0(%arg0: i32, %arg1: i32, %arg2: memref<1xf32, #tpu.memory_space<smem>>) -> (i32, i32, i32) {
    %c0_i32 = arith.constant 0 : i32
    %c0_i32_0 = arith.constant 0 : i32
    return %arg0, %c0_i32, %arg1 : i32, i32, i32
  }
  func.func @transform_1(%arg0: i32, %arg1: i32, %arg2: memref<1xf32, #tpu.memory_space<smem>>) -> (i32, i32, i32) {
    %c0_i32 = arith.constant 0 : i32
    %c0_i32_0 = arith.constant 0 : i32
    %c0_i32_1 = arith.constant 0 : i32
    return %arg0, %c0_i32, %c0_i32_0 : i32, i32, i32
  }
  func.func @transform_2(%arg0: i32, %arg1: i32, %arg2: memref<1xf32, #tpu.memory_space<smem>>) -> (i32, i32) {
    %c0_i32 = arith.constant 0 : i32
    %c0_i32_0 = arith.constant 0 : i32
    %c0_i32_1 = arith.constant 0 : i32
    return %c0_i32, %c0_i32_0 : i32, i32
  }
  func.func @transform_3(%arg0: i32, %arg1: i32, %arg2: memref<1xf32, #tpu.memory_space<smem>>) -> (i32, i32) {
    %c0_i32 = arith.constant 0 : i32
    %c0_i32_0 = arith.constant 0 : i32
    %c0_i32_1 = arith.constant 0 : i32
    return %c0_i32, %c0_i32_0 : i32, i32
  }
  func.func @transform_4(%arg0: i32, %arg1: i32, %arg2: memref<1xf32, #tpu.memory_space<smem>>) -> (i32, i32, i32) {
    %c0_i32 = arith.constant 0 : i32
    %c0_i32_0 = arith.constant 0 : i32
    return %arg0, %c0_i32, %arg1 : i32, i32, i32
  }
}

</mosaic_0001>

<llo_original>
// kernel: tpu_custom_call.1
$region0: #{tpu_custom_call.1}
  #allocation0 [shape = 'u32[]', space=smem, size = 0x4, offset = 0x4, fixed_abs, tag = 'smem constant byte address 0x4 - core index']
  #allocation1 [shape = 'u32[144,128]{1,0:T(1,128)}', space=vmem, size = 0x12000, scoped, tag = 'internal scratch']
  #allocation2 [shape = 's32[1]{0}', space=sflag, size = 0x4, scoped, tag = 'scoped memory for tpu_custom_call.1']
  #allocation3 [shape = 'f32[1]{0:T(128)S(6)}', space=smem, size = 0x200, scoped, tag = 'prefetched SMEM operand 0']
  %s0 = inlined_call_operand.<no memory space> [shape: f32[1], index: 0, kind: input, shape index: {}]
  %s1 = inlined_call_operand.vmem [shape: f32[2,4,512], index: 1, kind: input, shape index: {}]
  %s2 = inlined_call_operand.hbm [shape: f32[2,4,512], index: 2, kind: input, shape index: {}]
  %s3 = inlined_call_operand.vmem [shape: f32[13,4], index: 3, kind: input, shape index: {}]
  %s4 = inlined_call_operand.vmem [shape: f32[13,1], index: 4, kind: input, shape index: {}]
  %s5 = inlined_call_operand.hbm [shape: f32[2,4,512], index: 5, kind: output, shape index: {}]
  %s6 = sld [smem:[#allocation0]]
  $region53: #{tpu_custom_call.1} parent=0
    _
  %s8 = ssub.s32 1, %s6
  %s9 = scalar_select 0, %s8, %s6
  %10 = sst [smem:[#allocation3]] %s0
  $region1: #{tpu_custom_call.1} parent=0
    #allocation4 [shape = 'u8[16384]{0}', space=vmem, size = 0x4000, scoped, tag = 'input window, operand 2']
    #allocation5 [shape = 's32[2]{0}', space=sflag, size = 0x8, scoped, tag = 'scoped memory for tpu_custom_call.1']
    #allocation6 [shape = 's32[2]{0}', space=sflag, size = 0x8, scoped, tag = 'scoped memory for tpu_custom_call.1']
    #allocation7 [shape = 'u8[8192]{0}', space=vmem, size = 0x2000, scoped, tag = 'output window, operand 0']
    %11 = vsyncpa [#allocation5], 0
    %s12 = scalar_lea.sflag [#allocation5], 1
    %13 = vsyncpa %s12, 0
    %14 = vsyncpa [#allocation6], 0
    %s15 = scalar_lea.sflag [#allocation6], 1
    %16 = vsyncpa %s15, 0
    loop: start=0, step=1, limit=6
    $region2: #{tpu_custom_call.1} parent=1 // loop_pre_header
      _
    $region3: #{tpu_custom_call.1} parent=1 // loop_header
      %s18 = sphi 0, %s22
      %p19 = scmp.ge.s32.totalorder %s18, 6
      %s25 = sphi 0, %s37
      %s26 = sphi 0, %s33
      %s27 = sphi 0, %s25
      %s28 = sphi 0, %s26
      %s29 = sphi 0, %s27
      %s30 = sphi 0, %s28
      %s42 = sphi 0, %s44
      %s45 = sphi 0, %s42
      %s46 = sphi 0, %s45
      %s62 = sphi 0, %s46
      %s68 = sphi 0, %s70
      %s71 = sphi 0, %s68
      %s72 = sphi 0, %s71
      %s88 = sphi 0, %s72
      %s92 = sphi 0, %s92
      %s94 = sphi 0, %s92
      %s95 = sphi 0, %s94
      %s109 = sphi 0, %s95
      %s113 = sphi 0, %s113
      %s115 = sphi 0, %s113
      %s116 = sphi 0, %s115
      %s130 = sphi 0, %s116
      %s138 = sphi 0, %s140
      %s141 = sphi 0, %s138
      %s142 = sphi 0, %s141
      %s158 = sphi 0, %s142
    $region4: #{tpu_custom_call.1} parent=1 // loop_header_branch
      %21 = sbr.rel (%p19) target = $region8
    $region5: #{tpu_custom_call.1} parent=1 // loop_body
      %s23 = ssub.s32 %s18, 1
      %s24 = ssub.s32 %s18, 2
      %s31 = sadd.s32 1, %s26
      %p32 = scmp.ge.s32.totalorder %s31, 2
      %s33 = scalar_select %p32, 0, %s31
      %s34 = sadd.s32 1, %s25
      %s35 = scalar_select %p32, %s34, %s25
      %p36 = scmp.ge.s32.totalorder %s35, 2
      %s37 = scalar_select %p36, 0, %s35
      %s38 = ssub.s32 %s25, %s37
      %s39 = ssub.s32 %s26, %s33
      %s40 = sor.u32 %s38, %s39
      %p41 = scmp.eq.s32.totalorder %s40, 0
      %s43 = sadd.s32 %s42, 1
      %s44 = scalar_select %p41, %s42, %s43
      %p47 = pneg %p41
      %p48 = scmp.eq.s32.totalorder %s18, 3
      %p49 = por %p47, %p48
      %p50 = scmp.ne.s32.totalorder %s42, %s45
      %p51 = scmp.eq.s32.totalorder %s18, 0
      %p52 = por %p50, %p51
      %p53 = scmp.ne.s32.totalorder %s42, %s45
      %p54 = scmp.eq.s32.totalorder %s23, 3
      %p55 = por %p53, %p54
      %p56 = scmp.ne.s32.totalorder %s45, %s46
      %p57 = scmp.eq.s32.totalorder %s23, 0
      %p58 = por %p56, %p57
      %p59 = scmp.ne.s32.totalorder %s45, %s46
      %p60 = scmp.eq.s32.totalorder %s24, 3
      %p61 = por %p59, %p60
      %p63 = scmp.ne.s32.totalorder %s46, %s62
      %p64 = scmp.eq.s32.totalorder %s24, 0
      %p65 = por %p63, %p64
      %s66 = ssub.s32 %s25, %s37
      %p67 = scmp.eq.s32.totalorder %s66, 0
      %s69 = sadd.s32 %s68, 1
      %s70 = scalar_select %p67, %s68, %s69
      %p73 = pneg %p67
      %p74 = scmp.eq.s32.totalorder %s18, 3
      %p75 = por %p73, %p74
      %p76 = scmp.ne.s32.totalorder %s68, %s71
      %p77 = scmp.eq.s32.totalorder %s18, 0
      %p78 = por %p76, %p77
      %p79 = scmp.ne.s32.totalorder %s68, %s71
      %p80 = scmp.eq.s32.totalorder %s23, 3
      %p81 = por %p79, %p80
      %p82 = scmp.ne.s32.totalorder %s71, %s72
      %p83 = scmp.eq.s32.totalorder %s23, 0
      %p84 = por %p82, %p83
      %p85 = scmp.ne.s32.totalorder %s71, %s72
      %p86 = scmp.eq.s32.totalorder %s24, 3
      %p87 = por %p85, %p86
      %p89 = scmp.ne.s32.totalorder %s72, %s88
      %p90 = scmp.eq.s32.totalorder %s24, 0
      %p91 = por %p89, %p90
      %s93 = sadd.s32 %s92, 1
      %p96 = scmp.eq.s32.totalorder %s18, 3
      %p97 = scmp.ne.s32.totalorder %s92, %s94
      %p98 = scmp.eq.s32.totalorder %s18, 0
      %p99 = por %p97, %p98
      %p100 = scmp.ne.s32.totalorder %s92, %s94
      %p101 = scmp.eq.s32.totalorder %s23, 3
      %p102 = por %p100, %p101
      %p103 = scmp.ne.s32.totalorder %s94, %s95
      %p104 = scmp.eq.s32.totalorder %s23, 0
      %p105 = por %p103, %p104
      %p106 = scmp.ne.s32.totalorder %s94, %s95
      %p107 = scmp.eq.s32.totalorder %s24, 3
      %p108 = por %p106, %p107
      %p110 = scmp.ne.s32.totalorder %s95, %s109
      %p111 = scmp.eq.s32.totalorder %s24, 0
      %p112 = por %p110, %p111
      %s114 = sadd.s32 %s113, 1
      %p117 = scmp.eq.s32.totalorder %s18, 3
      %p118 = scmp.ne.s32.totalorder %s113, %s115
      %p119 = scmp.eq.s32.totalorder %s18, 0
      %p120 = por %p118, %p119
      %p121 = scmp.ne.s32.totalorder %s113, %s115
      %p122 = scmp.eq.s32.totalorder %s23, 3
      %p123 = por %p121, %p122
      %p124 = scmp.ne.s32.totalorder %s115, %s116
      %p125 = scmp.eq.s32.totalorder %s23, 0
      %p126 = por %p124, %p125
      %p127 = scmp.ne.s32.totalorder %s115, %s116
      %p128 = scmp.eq.s32.totalorder %s24, 3
      %p129 = por %p127, %p128
      %p131 = scmp.ne.s32.totalorder %s116, %s130
      %p132 = scmp.eq.s32.totalorder %s24, 0
      %p133 = por %p131, %p132
      %s134 = ssub.s32 %s25, %s37
      %s135 = ssub.s32 %s26, %s33
      %s136 = sor.u32 %s134, %s135
      %p137 = scmp.eq.s32.totalorder %s136, 0
      %s139 = sadd.s32 %s138, 1
      %s140 = scalar_select %p137, %s138, %s139
      %p143 = pneg %p137
      %p144 = scmp.eq.s32.totalorder %s18, 3
      %p145 = por %p143, %p144
      %p146 = scmp.ne.s32.totalorder %s138, %s141
      %p147 = scmp.eq.s32.totalorder %s18, 0
      %p148 = por %p146, %p147
      %p149 = scmp.ne.s32.totalorder %s138, %s141
      %p150 = scmp.eq.s32.totalorder %s23, 3
      %p151 = por %p149, %p150
      %p152 = scmp.ne.s32.totalorder %s141, %s142
      %p153 = scmp.eq.s32.totalorder %s23, 0
      %p154 = por %p152, %p153
      %p155 = scmp.ne.s32.totalorder %s141, %s142
      %p156 = scmp.eq.s32.totalorder %s24, 3
      %p157 = por %p155, %p156
      %p159 = scmp.ne.s32.totalorder %s142, %s158
      %p160 = scmp.eq.s32.totalorder %s24, 0
      %p161 = por %p159, %p160
      %p162 = scmp.le.s32.totalorder 1, %s18
      %p163 = scmp.lt.s32.totalorder %s18, 5
      %p164 = pnand %p162, %p163
      %p165 = pneg %p164
      // Predicated region
      $region9: #{tpu_custom_call.1} parent=5 // pred_check
        _
      $region10: #{tpu_custom_call.1} parent=5 // pred_check_branch
        %167 = sbr.rel (%p164) target = $region12
      $region11: #{tpu_custom_call.1} parent=5 // pred_region
        %s168 = ssub.s32 %s18, 1
        // Predicated region
        $region13: #{tpu_custom_call.1} parent=11 // pred_check
          %p169 = pneg %p105
        $region14: #{tpu_custom_call.1} parent=11 // pred_check_branch
          %171 = sbr.rel (%p169) target = $region16
        $region15: #{tpu_custom_call.1} parent=11 // pred_region
          _
        $region16: #{tpu_custom_call.1} parent=11 // pred_fallthru
          _
        // Predicated region
        $region17: #{tpu_custom_call.1} parent=11 // pred_check
          %p172 = pneg %p126
        $region18: #{tpu_custom_call.1} parent=11 // pred_check_branch
          %174 = sbr.rel (%p172) target = $region20
        $region19: #{tpu_custom_call.1} parent=11 // pred_region
          _
        $region20: #{tpu_custom_call.1} parent=11 // pred_fallthru
          _
      $region12: #{tpu_custom_call.1} parent=5 // pred_fallthru
        _
      %p175 = scmp.lt.s32.totalorder %s18, 4
      // Predicated region
      $region21: #{tpu_custom_call.1} parent=5 // pred_check
        %p176 = pneg %p175
      $region22: #{tpu_custom_call.1} parent=5 // pred_check_branch
        %178 = sbr.rel (%p176) target = $region24
      $region23: #{tpu_custom_call.1} parent=5 // pred_region
        // Predicated region
        $region25: #{tpu_custom_call.1} parent=23 // pred_check
          %p179 = pneg %p52
        $region26: #{tpu_custom_call.1} parent=23 // pred_check_branch
          %181 = sbr.rel (%p179) target = $region28
        $region27: #{tpu_custom_call.1} parent=23 // pred_region
          %s182 = smul.u32 2, %s26
          %p183 = scmp.lt.s32.totalorder %s25, 1
          %s184 = scalar_select %p183, %s25, 1
          %p185 = scmp.lt.s32.totalorder %s182, 3
          %s186 = scalar_select %p185, %s182, 3
          %s187 = smul.addr %s184, 4
          %s188 = sadd.s32 %s186, %s187
          %s189 = smul.addr %s188, 4
          %s190 = scalar_lea.vmem %s1, %s189
          %s191 = smul.u32 2, %s26
        $region28: #{tpu_custom_call.1} parent=23 // pred_fallthru
          _
        // Predicated region
        $region29: #{tpu_custom_call.1} parent=23 // pred_check
          %p192 = pneg %p78
        $region30: #{tpu_custom_call.1} parent=23 // pred_check_branch
          %194 = sbr.rel (%p192) target = $region32
        $region31: #{tpu_custom_call.1} parent=23 // pred_region
          %s195 = sand.u32 %s68, 1
          %s196 = scalar_lea.sflag [#allocation5], %s195
          %s197 = sand.u32 %s68, 1
          %s198 = smul.addr %s197, 16
          %s199 = scalar_lea.vmem [#allocation4], %s198
          %s201 = ssub.s32 256, 256
          %202 = vsyncadd %s196, %s201
          %s203 = smul.addr %s25, 4
          %s204 = smul.addr %s203, 64
          %s205 = scalar_lea.hbm %s2, %s204
          %s207 = sshll.u32 %s199, 4
          %s208 = int_to_ptr.vmem [resolvable:$true] %s207
          %210 = dma.hbm_to_vmem [thread:$0]  %s205, 256, %s208, %s196
        $region32: #{tpu_custom_call.1} parent=23 // pred_fallthru
          _
      $region24: #{tpu_custom_call.1} parent=5 // pred_fallthru
        _
      %p211 = scmp.le.s32.totalorder 1, %s18
      %p212 = scmp.lt.s32.totalorder %s18, 5
      %p213 = pnand %p211, %p212
      %p214 = pneg %p213
      // Predicated region
      $region33: #{tpu_custom_call.1} parent=5 // pred_check
        _
      $region34: #{tpu_custom_call.1} parent=5 // pred_check_branch
        %216 = sbr.rel (%p213) target = $region36
      $region35: #{tpu_custom_call.1} parent=5 // pred_region
        %s217 = ssub.s32 %s18, 1
        %s218 = sand.u32 %s71, 1
        %s219 = scalar_lea.sflag [#allocation5], %s218
        %s220 = sand.u32 %s71, 1
        %s221 = smul.addr %s220, 16
        %s222 = scalar_lea.vmem [#allocation4], %s221
        // Predicated region
        $region37: #{tpu_custom_call.1} parent=35 // pred_check
          %p223 = pneg %p84
        $region38: #{tpu_custom_call.1} parent=35 // pred_check_branch
          %225 = sbr.rel (%p223) target = $region40
        $region39: #{tpu_custom_call.1} parent=35 // pred_region
          %226 = dma.done %s219, 256
        $region40: #{tpu_custom_call.1} parent=35 // pred_fallthru
          _
        %s227 = smul.u32 2, %s28
        %p228 = scmp.lt.s32.totalorder %s27, 1
        %s229 = scalar_select %p228, %s27, 1
        %p230 = scmp.lt.s32.totalorder %s227, 3
        %s231 = scalar_select %p230, %s227, 3
        %s232 = smul.addr %s229, 4
        %s233 = sadd.s32 %s231, %s232
        %s234 = smul.addr %s233, 4
        %s235 = scalar_lea.vmem %s1, %s234
        %p236 = pneg %p58
        %p237 = pneg %p55
        %s238 = sand.u32 %s71, 1
        %s239 = scalar_lea.sflag [#allocation5], %s238
        %s240 = sand.u32 %s71, 1
        %s241 = smul.addr %s240, 16
        %s242 = scalar_lea.vmem [#allocation4], %s241
        %p243 = pneg %p84
        %p244 = pneg %p81
        %p245 = pneg %p105
        %p246 = pneg %p102
        %p247 = pneg %p126
        %p248 = pneg %p123
        %p249 = pneg %p154
        %p250 = pneg %p151
        %s251 = sand.u32 %s141, 1
        %s252 = scalar_lea.sflag [#allocation6], %s251
        %s253 = sand.u32 %s141, 1
        %s254 = smul.addr %s253, 8
        %s255 = scalar_lea.vmem [#allocation7], %s254
        %s256 = smul.u32 2, %s28
        %p257 = scmp.lt.s32.totalorder %s27, 1
        %s258 = scalar_select %p257, %s27, 1
        %p259 = scmp.lt.s32.totalorder %s256, 3
        %s260 = scalar_select %p259, %s256, 3
        %s261 = smul.addr %s258, 4
        %s262 = sadd.s32 %s260, %s261
        %s263 = smul.addr %s262, 4
        %s264 = scalar_lea.vmem %s1, %s263
        %s265 = smul.u32 2, %s28
        %s266 = smul.u32 2, %s28
        %v268 = vld [vmem:[%s264] sm:$0xff]
        %v269 = vld [vmem:[%s222] sm:$0xff]
        %v270 = vld [vmem:[%s222 + $0x8] sm:$0xff]
        %v271 = vld [vmem:[%s3] sm:$0xff]
        %v272 = vld [vmem:[%s3 + $0x8] sm:$0x1f]
        %v273 = vld [vmem:[%s4] sm:$0xff]
        %v274 = vld [vmem:[%s4 + $0x8] sm:$0x1f]
        %276 = vset.pattern.permute.xlu0 0
        %277 = vperm.xlu0 %276, %v273
        %v278 = vpop.permute.xlu0 %277
        %280 = vset.pattern.permute.xlu0 0
        %281 = vperm.xlu0 %280, %v274
        %v282 = vpop.permute.xlu0 %281
        %vm285 = vcmask 1043456
        %v286 = vrot.slane %v271, 4
        %v287 = vrot.slane %v272, 4
        %v288 = vsel %vm285, %v286, %v287
        %v291 = vcombine.high %v269, %v269
        %v292 = vcombine.high %v270, %v270
        %v293 = vrot.slane %v278, 4
        %v294 = vrot.slane %v282, 4
        %v295 = vsel %vm285, %v293, %v294
        %vm298 = vcmask 31744
        %v299 = vsel %vm298, %v288, 0
        %v301 = vsel %vm298, %v287, 0
        %v303 = vsel %vm285, %v269, 0
        %v305 = vsel %vm285, %v291, 0
        %v307 = vsel %vm285, %v270, 0
        %v309 = vsel %vm285, %v292, 0
        %311 = vmatprep.subr.mxu0 %v305
        %312 = vmatpush1.msra.mxu0 %v303
        %313 = vmatprep.subr.mxu0 0.0
        %314 = vmatpush1.msra.mxu0 0.0
        %315 = vmatprep.subr.mxu0 0.0
        %316 = vmatpush1.msra.mxu0 0.0
        %317 = vmatprep.subr.mxu0 0.0
        %318 = vmatpush1.msra.mxu0 0.0
        %319 = vmatprep.subr.mxu0 0.0
        %320 = vmatpush1.msra.mxu0 0.0
        %321 = vmatprep.subr.mxu0 0.0
        %322 = vmatpush1.msra.mxu0 0.0
        %323 = vmatprep.subr.mxu0 0.0
        %324 = vmatpush1.msra.mxu0 0.0
        %325 = vmatprep.subr.mxu0 0.0
        %326 = vmatpush1.msra.mxu0 0.0
        %327 = vmatprep.subr.mxu0 0.0
        %328 = vmatpush1.msra.mxu0 0.0
        %329 = vmatprep.subr.mxu0 0.0
        %330 = vmatpush1.msra.mxu0 0.0
        %331 = vmatprep.subr.mxu0 0.0
        %332 = vmatpush1.msra.mxu0 0.0
        %333 = vmatprep.subr.mxu0 0.0
        %334 = vmatpush1.msra.mxu0 0.0
        %335 = vmatprep.subr.mxu0 0.0
        %336 = vmatpush1.msra.mxu0 0.0
        %337 = vmatprep.subr.mxu0 0.0
        %338 = vmatpush1.msra.mxu0 0.0
        %339 = vmatprep.subr.mxu0 0.0
        %340 = vmatpush1.msra.mxu0 0.0
        %341 = vmatprep.subr.mxu0 0.0
        %342 = vmatpush1.msra.mxu0 0.0
        %343 = vmatprep.subr.mxu0 0.0
        %344 = vmatpush1.msra.mxu0 0.0
        %345 = vmatprep.subr.mxu0 0.0
        %346 = vmatpush1.msra.mxu0 0.0
        %347 = vmatprep.subr.mxu0 0.0
        %348 = vmatpush1.msra.mxu0 0.0
        %349 = vmatprep.subr.mxu0 0.0
        %350 = vmatpush1.msra.mxu0 0.0
        %351 = vmatprep.subr.mxu0 0.0
        %352 = vmatpush1.msra.mxu0 0.0
        %353 = vmatprep.subr.mxu0 0.0
        %354 = vmatpush1.msra.mxu0 0.0
        %355 = vmatprep.subr.mxu0 0.0
        %356 = vmatpush1.msra.mxu0 0.0
        %357 = vmatprep.subr.mxu0 0.0
        %358 = vmatpush1.msra.mxu0 0.0
        %359 = vmatprep.subr.mxu0 0.0
        %360 = vmatpush1.msra.mxu0 0.0
        %361 = vmatprep.subr.mxu0 0.0
        %362 = vmatpush1.msra.mxu0 0.0
        %363 = vmatprep.subr.mxu0 0.0
        %364 = vmatpush1.msra.mxu0 0.0
        %365 = vmatprep.subr.mxu0 0.0
        %366 = vmatpush1.msra.mxu0 0.0
        %367 = vmatprep.subr.mxu0 0.0
        %368 = vmatpush1.msra.mxu0 0.0
        %369 = vmatprep.subr.mxu0 0.0
        %370 = vmatpush1.msra.mxu0 0.0
        %371 = vmatprep.subr.mxu0 0.0
        %372 = vmatpush1.msra.mxu0 0.0
        %373 = vmatprep.subr.mxu0 0.0
        %374 = vmatpush1.msra.mxu0 0.0
        %375 = vmatprep.mubr.f32.mxu0 0.0
        %376 = vmatmul.mubr.f32.gmra.mrb[0].mxu0 %v299
        %v377 = vpop.f32.mrb[0].mxu0
        %v378 = vadd.f32 %v295, %v377
        %v379 = vpop.f32.mrb[0].mxu0
        %v380 = vadd.f32 %v295, %v379
        %381 = vmatprep.mubr.f32.mxu0 0.0
        %382 = vmatmul.mubr.f32.gmra.mrb[0].mxu0 %v301
        %v383 = vpop.f32.mrb[0].mxu0
        %v384 = vadd.f32 %v294, %v383
        %v385 = vpop.f32.mrb[0].mxu0
        %v386 = vadd.f32 %v294, %v385
        %387 = vdwg.mxu0
        %388 = vmatprep.subr.mxu0 %v309
        %389 = vmatpush1.msra.mxu0 %v307
        %390 = vmatprep.subr.mxu0 0.0
        %391 = vmatpush1.msra.mxu0 0.0
        %392 = vmatprep.subr.mxu0 0.0
        %393 = vmatpush1.msra.mxu0 0.0
        %394 = vmatprep.subr.mxu0 0.0
        %395 = vmatpush1.msra.mxu0 0.0
        %396 = vmatprep.subr.mxu0 0.0
        %397 = vmatpush1.msra.mxu0 0.0
        %398 = vmatprep.subr.mxu0 0.0
        %399 = vmatpush1.msra.mxu0 0.0
        %400 = vmatprep.subr.mxu0 0.0
        %401 = vmatpush1.msra.mxu0 0.0
        %402 = vmatprep.subr.mxu0 0.0
        %403 = vmatpush1.msra.mxu0 0.0
        %404 = vmatprep.subr.mxu0 0.0
        %405 = vmatpush1.msra.mxu0 0.0
        %406 = vmatprep.subr.mxu0 0.0
        %407 = vmatpush1.msra.mxu0 0.0
        %408 = vmatprep.subr.mxu0 0.0
        %409 = vmatpush1.msra.mxu0 0.0
        %410 = vmatprep.subr.mxu0 0.0
        %411 = vmatpush1.msra.mxu0 0.0
        %412 = vmatprep.subr.mxu0 0.0
        %413 = vmatpush1.msra.mxu0 0.0
        %414 = vmatprep.subr.mxu0 0.0
        %415 = vmatpush1.msra.mxu0 0.0
        %416 = vmatprep.subr.mxu0 0.0
        %417 = vmatpush1.msra.mxu0 0.0
        %418 = vmatprep.subr.mxu0 0.0
        %419 = vmatpush1.msra.mxu0 0.0
        %420 = vmatprep.subr.mxu0 0.0
        %421 = vmatpush1.msra.mxu0 0.0
        %422 = vmatprep.subr.mxu0 0.0
        %423 = vmatpush1.msra.mxu0 0.0
        %424 = vmatprep.subr.mxu0 0.0
        %425 = vmatpush1.msra.mxu0 0.0
        %426 = vmatprep.subr.mxu0 0.0
        %427 = vmatpush1.msra.mxu0 0.0
        %428 = vmatprep.subr.mxu0 0.0
        %429 = vmatpush1.msra.mxu0 0.0
        %430 = vmatprep.subr.mxu0 0.0
        %431 = vmatpush1.msra.mxu0 0.0
        %432 = vmatprep.subr.mxu0 0.0
        %433 = vmatpush1.msra.mxu0 0.0
        %434 = vmatprep.subr.mxu0 0.0
        %435 = vmatpush1.msra.mxu0 0.0
        %436 = vmatprep.subr.mxu0 0.0
        %437 = vmatpush1.msra.mxu0 0.0
        %438 = vmatprep.subr.mxu0 0.0
        %439 = vmatpush1.msra.mxu0 0.0
        %440 = vmatprep.subr.mxu0 0.0
        %441 = vmatpush1.msra.mxu0 0.0
        %442 = vmatprep.subr.mxu0 0.0
        %443 = vmatpush1.msra.mxu0 0.0
        %444 = vmatprep.subr.mxu0 0.0
        %445 = vmatpush1.msra.mxu0 0.0
        %446 = vmatprep.subr.mxu0 0.0
        %447 = vmatpush1.msra.mxu0 0.0
        %448 = vmatprep.subr.mxu0 0.0
        %449 = vmatpush1.msra.mxu0 0.0
        %450 = vmatprep.subr.mxu0 0.0
        %451 = vmatpush1.msra.mxu0 0.0
        %452 = vmatprep.mubr.f32.mxu0 0.0
        %453 = vmatmul.mubr.f32.gmra.mrb[0].mxu0 %v299
        %v454 = vpop.f32.mrb[0].mxu0
        %v455 = vadd.f32 %v295, %v454
        %v456 = vpop.f32.mrb[0].mxu0
        %v457 = vadd.f32 %v295, %v456
        %458 = vmatprep.mubr.f32.mxu0 0.0
        %459 = vmatmul.mubr.f32.gmra.mrb[0].mxu0 %v301
        %v460 = vpop.f32.mrb[0].mxu0
        %v461 = vadd.f32 %v294, %v460
        %v462 = vpop.f32.mrb[0].mxu0
        %v463 = vadd.f32 %v294, %v462
        %464 = vdwg.mxu0
        %v467 = vcombine.high %v268, %v268
        %v468 = vsel %vm298, %v271, 0
        %v470 = vsel %vm285, %v268, 0
        %v472 = vsel %vm285, %v467, 0
        %474 = vmatprep.subr.mxu0 %v472
        %475 = vmatpush1.msra.mxu0 %v470
        %476 = vmatprep.subr.mxu0 0.0
        %477 = vmatpush1.msra.mxu0 0.0
        %478 = vmatprep.subr.mxu0 0.0
        %479 = vmatpush1.msra.mxu0 0.0
        %480 = vmatprep.subr.mxu0 0.0
        %481 = vmatpush1.msra.mxu0 0.0
        %482 = vmatprep.subr.mxu0 0.0
        %483 = vmatpush1.msra.mxu0 0.0
        %484 = vmatprep.subr.mxu0 0.0
        %485 = vmatpush1.msra.mxu0 0.0
        %486 = vmatprep.subr.mxu0 0.0
        %487 = vmatpush1.msra.mxu0 0.0
        %488 = vmatprep.subr.mxu0 0.0
        %489 = vmatpush1.msra.mxu0 0.0
        %490 = vmatprep.subr.mxu0 0.0
        %491 = vmatpush1.msra.mxu0 0.0
        %492 = vmatprep.subr.mxu0 0.0
        %493 = vmatpush1.msra.mxu0 0.0
        %494 = vmatprep.subr.mxu0 0.0
        %495 = vmatpush1.msra.mxu0 0.0
        %496 = vmatprep.subr.mxu0 0.0
        %497 = vmatpush1.msra.mxu0 0.0
        %498 = vmatprep.subr.mxu0 0.0
        %499 = vmatpush1.msra.mxu0 0.0
        %500 = vmatprep.subr.mxu0 0.0
        %501 = vmatpush1.msra.mxu0 0.0
        %502 = vmatprep.subr.mxu0 0.0
        %503 = vmatpush1.msra.mxu0 0.0
        %504 = vmatprep.subr.mxu0 0.0
        %505 = vmatpush1.msra.mxu0 0.0
        %506 = vmatprep.subr.mxu0 0.0
        %507 = vmatpush1.msra.mxu0 0.0
        %508 = vmatprep.subr.mxu0 0.0
        %509 = vmatpush1.msra.mxu0 0.0
        %510 = vmatprep.subr.mxu0 0.0
        %511 = vmatpush1.msra.mxu0 0.0
        %512 = vmatprep.subr.mxu0 0.0
        %513 = vmatpush1.msra.mxu0 0.0
        %514 = vmatprep.subr.mxu0 0.0
        %515 = vmatpush1.msra.mxu0 0.0
        %516 = vmatprep.subr.mxu0 0.0
        %517 = vmatpush1.msra.mxu0 0.0
        %518 = vmatprep.subr.mxu0 0.0
        %519 = vmatpush1.msra.mxu0 0.0
        %520 = vmatprep.subr.mxu0 0.0
        %521 = vmatpush1.msra.mxu0 0.0
        %522 = vmatprep.subr.mxu0 0.0
        %523 = vmatpush1.msra.mxu0 0.0
        %524 = vmatprep.subr.mxu0 0.0
        %525 = vmatpush1.msra.mxu0 0.0
        %526 = vmatprep.subr.mxu0 0.0
        %527 = vmatpush1.msra.mxu0 0.0
        %528 = vmatprep.subr.mxu0 0.0
        %529 = vmatpush1.msra.mxu0 0.0
        %530 = vmatprep.subr.mxu0 0.0
        %531 = vmatpush1.msra.mxu0 0.0
        %532 = vmatprep.subr.mxu0 0.0
        %533 = vmatpush1.msra.mxu0 0.0
        %534 = vmatprep.subr.mxu0 0.0
        %535 = vmatpush1.msra.mxu0 0.0
        %536 = vmatprep.subr.mxu0 0.0
        %537 = vmatpush1.msra.mxu0 0.0
        %538 = vmatprep.mubr.f32.mxu0 0.0
        %539 = vmatmul.mubr.f32.gmra.mrb[0].mxu0 %v468
        %v540 = vpop.f32.mrb[0].mxu0
        %v541 = vadd.f32 %v278, %v540
        %v542 = vpop.f32.mrb[0].mxu0
        %v543 = vadd.f32 %v278, %v542
        %544 = vdwg.mxu0
        %v545 = vpack.c.bf16 %v378, %v378
        %v546 = vpack.c.bf16 %v380, %v380
        %v547 = vpack.c.bf16 %v455, %v455
        %v548 = vpack.c.bf16 %v457, %v457
        %v549 = vpack.c.bf16 %v541, %v541
        %v550 = vpack.c.bf16 %v543, %v543
        %551 = vxpose.xlu0.c.b16.start [1/8] %v545, 128
        %552 = vxpose.xlu0.c.b16.cont [2/8] 0, 128
        %553 = vxpose.xlu0.c.b16.cont [3/8] 0, 128
        %554 = vxpose.xlu0.c.b16.cont [4/8] 0, 128
        %555 = vxpose.xlu0.c.b16.cont [5/8] 0, 128
        %556 = vxpose.xlu0.c.b16.cont [6/8] 0, 128
        %557 = vxpose.xlu0.c.b16.cont [7/8] 0, 128
        %558 = vxpose.xlu0.c.b16.end [8/8] 0, 128
        %v559 = vpop.trf.xlu0
        %v560 = vpop.trf.xlu0
        %v561 = vpop.trf.xlu0
        %v562 = vpop.trf.xlu0
        %v563 = vpop.trf.xlu0
        %v564 = vpop.trf.xlu0
        %v565 = vpop.trf.xlu0
        %v566 = vpop.trf.xlu0
        %567 = vxpose.xlu0.c.b16.start [1/8] %v546, 128
        %568 = vxpose.xlu0.c.b16.cont [2/8] 0, 128
        %569 = vxpose.xlu0.c.b16.cont [3/8] 0, 128
        %570 = vxpose.xlu0.c.b16.cont [4/8] 0, 128
        %571 = vxpose.xlu0.c.b16.cont [5/8] 0, 128
        %572 = vxpose.xlu0.c.b16.cont [6/8] 0, 128
        %573 = vxpose.xlu0.c.b16.cont [7/8] 0, 128
        %574 = vxpose.xlu0.c.b16.end [8/8] 0, 128
        %v575 = vpop.trf.xlu0
        %v576 = vpop.trf.xlu0
        %v577 = vpop.trf.xlu0
        %v578 = vpop.trf.xlu0
        %v579 = vpop.trf.xlu0
        %v580 = vpop.trf.xlu0
        %v581 = vpop.trf.xlu0
        %v582 = vpop.trf.xlu0
        %583 = vxpose.xlu0.c.b16.start [1/8] %v547, 128
        %584 = vxpose.xlu0.c.b16.cont [2/8] 0, 128
        %585 = vxpose.xlu0.c.b16.cont [3/8] 0, 128
        %586 = vxpose.xlu0.c.b16.cont [4/8] 0, 128
        %587 = vxpose.xlu0.c.b16.cont [5/8] 0, 128
        %588 = vxpose.xlu0.c.b16.cont [6/8] 0, 128
        %589 = vxpose.xlu0.c.b16.cont [7/8] 0, 128
        %590 = vxpose.xlu0.c.b16.end [8/8] 0, 128
        %v591 = vpop.trf.xlu0
        %v592 = vpop.trf.xlu0
        %v593 = vpop.trf.xlu0
        %v594 = vpop.trf.xlu0
        %v595 = vpop.trf.xlu0
        %v596 = vpop.trf.xlu0
        %v597 = vpop.trf.xlu0
        %v598 = vpop.trf.xlu0
        %599 = vxpose.xlu0.c.b16.start [1/8] %v548, 128
        %600 = vxpose.xlu0.c.b16.cont [2/8] 0, 128
        %601 = vxpose.xlu0.c.b16.cont [3/8] 0, 128
        %602 = vxpose.xlu0.c.b16.cont [4/8] 0, 128
        %603 = vxpose.xlu0.c.b16.cont [5/8] 0, 128
        %604 = vxpose.xlu0.c.b16.cont [6/8] 0, 128
        %605 = vxpose.xlu0.c.b16.cont [7/8] 0, 128
        %606 = vxpose.xlu0.c.b16.end [8/8] 0, 128
        %v607 = vpop.trf.xlu0
        %v608 = vpop.trf.xlu0
        %v609 = vpop.trf.xlu0
        %v610 = vpop.trf.xlu0
        %v611 = vpop.trf.xlu0
        %v612 = vpop.trf.xlu0
        %v613 = vpop.trf.xlu0
        %v614 = vpop.trf.xlu0
        %v616 = vsel %vm298, %v559, 0
        %v619 = vsel %vm298, %v560, 0
        %v622 = vsel %vm298, %v561, 0
        %v625 = vsel %vm298, %v562, 0
        %v628 = vsel %vm298, %v563, 0
        %v631 = vsel %vm298, %v564, 0
        %v634 = vsel %vm298, %v565, 0
        %v637 = vsel %vm298, %v566, 0
        %v640 = vsel %vm298, %v575, 0
        %v643 = vsel %vm298, %v576, 0
        %v646 = vsel %vm298, %v577, 0
        %v649 = vsel %vm298, %v578, 0
        %v652 = vsel %vm298, %v579, 0
        %v655 = vsel %vm298, %v580, 0
        %v658 = vsel %vm298, %v581, 0
        %v661 = vsel %vm298, %v582, 0
        %v664 = vsel %vm298, %v591, 0
        %v667 = vsel %vm298, %v592, 0
        %v670 = vsel %vm298, %v593, 0
        %v673 = vsel %vm298, %v594, 0
        %v676 = vsel %vm298, %v595, 0
        %v679 = vsel %vm298, %v596, 0
        %v682 = vsel %vm298, %v597, 0
        %v685 = vsel %vm298, %v598, 0
        %v688 = vsel %vm298, %v607, 0
        %v691 = vsel %vm298, %v608, 0
        %v694 = vsel %vm298, %v609, 0
        %v697 = vsel %vm298, %v610, 0
        %v700 = vsel %vm298, %v611, 0
        %v703 = vsel %vm298, %v612, 0
        %v706 = vsel %vm298, %v613, 0
        %v709 = vsel %vm298, %v614, 0
        %vm711 = vcmask 1041408
        %v713 = vsel %vm711, %v549, 0
        %v716 = vsel %vm711, %v550, 0
        %718 = vmatprep.subr.bf16.mxu0 %v716
        %719 = vmatpush1.bf16.msra.mxu0 %v713
        %720 = vmatprep.subr.bf16.mxu0 0
        %721 = vmatpush1.bf16.msra.mxu0 0
        %722 = vmatprep.subr.bf16.mxu0 0
        %723 = vmatpush1.bf16.msra.mxu0 0
        %724 = vmatprep.subr.bf16.mxu0 0
        %725 = vmatpush1.bf16.msra.mxu0 0
        %726 = vmatprep.subr.bf16.mxu0 0
        %727 = vmatpush1.bf16.msra.mxu0 0
        %728 = vmatprep.subr.bf16.mxu0 0
        %729 = vmatpush1.bf16.msra.mxu0 0
        %730 = vmatprep.subr.bf16.mxu0 0
        %731 = vmatpush1.bf16.msra.mxu0 0
        %732 = vmatprep.subr.bf16.mxu0 0
        %733 = vmatpush1.bf16.msra.mxu0 0
        %734 = vmatprep.subr.bf16.mxu0 0
        %735 = vmatpush1.bf16.msra.mxu0 0
        %736 = vmatprep.subr.bf16.mxu0 0
        %737 = vmatpush1.bf16.msra.mxu0 0
        %738 = vmatprep.subr.bf16.mxu0 0
        %739 = vmatpush1.bf16.msra.mxu0 0
        %740 = vmatprep.subr.bf16.mxu0 0
        %741 = vmatpush1.bf16.msra.mxu0 0
        %742 = vmatprep.subr.bf16.mxu0 0
        %743 = vmatpush1.bf16.msra.mxu0 0
        %744 = vmatprep.subr.bf16.mxu0 0
        %745 = vmatpush1.bf16.msra.mxu0 0
        %746 = vmatprep.subr.bf16.mxu0 0
        %747 = vmatpush1.bf16.msra.mxu0 0
        %748 = vmatprep.subr.bf16.mxu0 0
        %749 = vmatpush1.bf16.msra.mxu0 0
        %750 = vmatprep.mubr.bf16.mxu0 0
        %751 = vmatmul.mubr.bf16.gmra.mrb[0].mxu0 %v616
        %v752 = vpop.f32.mrb[0].mxu0
        %v753 = vadd.f32 0.0, %v752
        %v754 = vpop.f32.mrb[0].mxu0
        %v755 = vadd.f32 0.0, %v754
        %v756 = vpop.f32.mrb[0].mxu0
        %v757 = vadd.f32 0.0, %v756
        %v758 = vpop.f32.mrb[0].mxu0
        %v759 = vadd.f32 0.0, %v758
        %760 = vmatprep.mubr.bf16.mxu0 0
        %761 = vmatmul.mubr.bf16.gmra.mrb[0].mxu0 %v619
        %v762 = vpop.f32.mrb[0].mxu0
        %v763 = vadd.f32 0.0, %v762
        %v764 = vpop.f32.mrb[0].mxu0
        %v765 = vadd.f32 0.0, %v764
        %v766 = vpop.f32.mrb[0].mxu0
        %v767 = vadd.f32 0.0, %v766
        %v768 = vpop.f32.mrb[0].mxu0
        %v769 = vadd.f32 0.0, %v768
        %770 = vmatprep.mubr.bf16.mxu0 0
        %771 = vmatmul.mubr.bf16.gmra.mrb[0].mxu0 %v622
        %v772 = vpop.f32.mrb[0].mxu0
        %v773 = vadd.f32 0.0, %v772
        %v774 = vpop.f32.mrb[0].mxu0
        %v775 = vadd.f32 0.0, %v774
        %v776 = vpop.f32.mrb[0].mxu0
        %v777 = vadd.f32 0.0, %v776
        %v778 = vpop.f32.mrb[0].mxu0
        %v779 = vadd.f32 0.0, %v778
        %780 = vmatprep.mubr.bf16.mxu0 0
        %781 = vmatmul.mubr.bf16.gmra.mrb[0].mxu0 %v625
        %v782 = vpop.f32.mrb[0].mxu0
        %v783 = vadd.f32 0.0, %v782
        %v784 = vpop.f32.mrb[0].mxu0
        %v785 = vadd.f32 0.0, %v784
        %v786 = vpop.f32.mrb[0].mxu0
        %v787 = vadd.f32 0.0, %v786
        %v788 = vpop.f32.mrb[0].mxu0
        %v789 = vadd.f32 0.0, %v788
        %790 = vmatprep.mubr.bf16.mxu0 0
        %791 = vmatmul.mubr.bf16.gmra.mrb[0].mxu0 %v628
        %v792 = vpop.f32.mrb[0].mxu0
        %v793 = vadd.f32 0.0, %v792
        %v794 = vpop.f32.mrb[0].mxu0
        %v795 = vadd.f32 0.0, %v794
        %v796 = vpop.f32.mrb[0].mxu0
        %v797 = vadd.f32 0.0, %v796
        %v798 = vpop.f32.mrb[0].mxu0
        %v799 = vadd.f32 0.0, %v798
        %800 = vmatprep.mubr.bf16.mxu0 0
        %801 = vmatmul.mubr.bf16.gmra.mrb[0].mxu0 %v631
        %v802 = vpop.f32.mrb[0].mxu0
        %v803 = vadd.f32 0.0, %v802
        %v804 = vpop.f32.mrb[0].mxu0
        %v805 = vadd.f32 0.0, %v804
        %v806 = vpop.f32.mrb[0].mxu0
        %v807 = vadd.f32 0.0, %v806
        %v808 = vpop.f32.mrb[0].mxu0
        %v809 = vadd.f32 0.0, %v808
        %810 = vmatprep.mubr.bf16.mxu0 0
        %811 = vmatmul.mubr.bf16.gmra.mrb[0].mxu0 %v634
        %v812 = vpop.f32.mrb[0].mxu0
        %v813 = vadd.f32 0.0, %v812
        %v814 = vpop.f32.mrb[0].mxu0
        %v815 = vadd.f32 0.0, %v814
        %v816 = vpop.f32.mrb[0].mxu0
        %v817 = vadd.f32 0.0, %v816
        %v818 = vpop.f32.mrb[0].mxu0
        %v819 = vadd.f32 0.0, %v818
        %820 = vmatprep.mubr.bf16.mxu0 0
        %821 = vmatmul.mubr.bf16.gmra.mrb[0].mxu0 %v637
        %v822 = vpop.f32.mrb[0].mxu0
        %v823 = vadd.f32 0.0, %v822
        %v824 = vpop.f32.mrb[0].mxu0
        %v825 = vadd.f32 0.0, %v824
        %v826 = vpop.f32.mrb[0].mxu0
        %v827 = vadd.f32 0.0, %v826
        %v828 = vpop.f32.mrb[0].mxu0
        %v829 = vadd.f32 0.0, %v828
        %830 = vmatprep.mubr.bf16.mxu0 0
        %831 = vmatmul.mubr.bf16.gmra.mrb[0].mxu0 %v640
        %v832 = vpop.f32.mrb[0].mxu0
        %v833 = vadd.f32 0.0, %v832
        %v834 = vpop.f32.mrb[0].mxu0
        %v835 = vadd.f32 0.0, %v834
        %v836 = vpop.f32.mrb[0].mxu0
        %v837 = vadd.f32 0.0, %v836
        %v838 = vpop.f32.mrb[0].mxu0
        %v839 = vadd.f32 0.0, %v838
        %840 = vmatprep.mubr.bf16.mxu0 0
        %841 = vmatmul.mubr.bf16.gmra.mrb[0].mxu0 %v643
        %v842 = vpop.f32.mrb[0].mxu0
        %v843 = vadd.f32 0.0, %v842
        %v844 = vpop.f32.mrb[0].mxu0
        %v845 = vadd.f32 0.0, %v844
        %v846 = vpop.f32.mrb[0].mxu0
        %v847 = vadd.f32 0.0, %v846
        %v848 = vpop.f32.mrb[0].mxu0
        %v849 = vadd.f32 0.0, %v848
        %850 = vmatprep.mubr.bf16.mxu0 0
        %851 = vmatmul.mubr.bf16.gmra.mrb[0].mxu0 %v646
        %v852 = vpop.f32.mrb[0].mxu0
        %v853 = vadd.f32 0.0, %v852
        %v854 = vpop.f32.mrb[0].mxu0
        %v855 = vadd.f32 0.0, %v854
        %v856 = vpop.f32.mrb[0].mxu0
        %v857 = vadd.f32 0.0, %v856
        %v858 = vpop.f32.mrb[0].mxu0
        %v859 = vadd.f32 0.0, %v858
        %860 = vmatprep.mubr.bf16.mxu0 0
        %861 = vmatmul.mubr.bf16.gmra.mrb[0].mxu0 %v649
        %v862 = vpop.f32.mrb[0].mxu0
        %v863 = vadd.f32 0.0, %v862
        %v864 = vpop.f32.mrb[0].mxu0
        %v865 = vadd.f32 0.0, %v864
        %v866 = vpop.f32.mrb[0].mxu0
        %v867 = vadd.f32 0.0, %v866
        %v868 = vpop.f32.mrb[0].mxu0
        %v869 = vadd.f32 0.0, %v868
        %870 = vmatprep.mubr.bf16.mxu0 0
        %871 = vmatmul.mubr.bf16.gmra.mrb[0].mxu0 %v652
        %v872 = vpop.f32.mrb[0].mxu0
        %v873 = vadd.f32 0.0, %v872
        %v874 = vpop.f32.mrb[0].mxu0
        %v875 = vadd.f32 0.0, %v874
        %v876 = vpop.f32.mrb[0].mxu0
        %v877 = vadd.f32 0.0, %v876
        %v878 = vpop.f32.mrb[0].mxu0
        %v879 = vadd.f32 0.0, %v878
        %880 = vmatprep.mubr.bf16.mxu0 0
        %881 = vmatmul.mubr.bf16.gmra.mrb[0].mxu0 %v655
        %v882 = vpop.f32.mrb[0].mxu0
        %v883 = vadd.f32 0.0, %v882
        %v884 = vpop.f32.mrb[0].mxu0
        %v885 = vadd.f32 0.0, %v884
        %v886 = vpop.f32.mrb[0].mxu0
        %v887 = vadd.f32 0.0, %v886
        %v888 = vpop.f32.mrb[0].mxu0
        %v889 = vadd.f32 0.0, %v888
        %890 = vmatprep.mubr.bf16.mxu0 0
        %891 = vmatmul.mubr.bf16.gmra.mrb[0].mxu0 %v658
        %v892 = vpop.f32.mrb[0].mxu0
        %v893 = vadd.f32 0.0, %v892
        %v894 = vpop.f32.mrb[0].mxu0
        %v895 = vadd.f32 0.0, %v894
        %v896 = vpop.f32.mrb[0].mxu0
        %v897 = vadd.f32 0.0, %v896
        %v898 = vpop.f32.mrb[0].mxu0
        %v899 = vadd.f32 0.0, %v898
        %900 = vmatprep.mubr.bf16.mxu0 0
        %901 = vmatmul.mubr.bf16.gmra.mrb[0].mxu0 %v661
        %v902 = vpop.f32.mrb[0].mxu0
        %v903 = vadd.f32 0.0, %v902
        %v904 = vpop.f32.mrb[0].mxu0
        %v905 = vadd.f32 0.0, %v904
        %v906 = vpop.f32.mrb[0].mxu0
        %v907 = vadd.f32 0.0, %v906
        %v908 = vpop.f32.mrb[0].mxu0
        %v909 = vadd.f32 0.0, %v908
        %910 = vmatprep.mubr.bf16.mxu0 0
        %911 = vmatmul.mubr.bf16.gmra.mrb[0].mxu0 %v664
        %v912 = vpop.f32.mrb[0].mxu0
        %v913 = vadd.f32 0.0, %v912
        %v914 = vpop.f32.mrb[0].mxu0
        %v915 = vadd.f32 0.0, %v914
        %v916 = vpop.f32.mrb[0].mxu0
        %v917 = vadd.f32 0.0, %v916
        %v918 = vpop.f32.mrb[0].mxu0
        %v919 = vadd.f32 0.0, %v918
        %920 = vmatprep.mubr.bf16.mxu0 0
        %921 = vmatmul.mubr.bf16.gmra.mrb[0].mxu0 %v667
        %v922 = vpop.f32.mrb[0].mxu0
        %v923 = vadd.f32 0.0, %v922
        %v924 = vpop.f32.mrb[0].mxu0
        %v925 = vadd.f32 0.0, %v924
        %v926 = vpop.f32.mrb[0].mxu0
        %v927 = vadd.f32 0.0, %v926
        %v928 = vpop.f32.mrb[0].mxu0
        %v929 = vadd.f32 0.0, %v928
        %930 = vmatprep.mubr.bf16.mxu0 0
        %931 = vmatmul.mubr.bf16.gmra.mrb[0].mxu0 %v670
        %v932 = vpop.f32.mrb[0].mxu0
        %v933 = vadd.f32 0.0, %v932
        %v934 = vpop.f32.mrb[0].mxu0
        %v935 = vadd.f32 0.0, %v934
        %v936 = vpop.f32.mrb[0].mxu0
        %v937 = vadd.f32 0.0, %v936
        %v938 = vpop.f32.mrb[0].mxu0
        %v939 = vadd.f32 0.0, %v938
        %940 = vmatprep.mubr.bf16.mxu0 0
        %941 = vmatmul.mubr.bf16.gmra.mrb[0].mxu0 %v673
        %v942 = vpop.f32.mrb[0].mxu0
        %v943 = vadd.f32 0.0, %v942
        %v944 = vpop.f32.mrb[0].mxu0
        %v945 = vadd.f32 0.0, %v944
        %v946 = vpop.f32.mrb[0].mxu0
        %v947 = vadd.f32 0.0, %v946
        %v948 = vpop.f32.mrb[0].mxu0
        %v949 = vadd.f32 0.0, %v948
        %950 = vmatprep.mubr.bf16.mxu0 0
        %951 = vmatmul.mubr.bf16.gmra.mrb[0].mxu0 %v676
        %v952 = vpop.f32.mrb[0].mxu0
        %v953 = vadd.f32 0.0, %v952
        %v954 = vpop.f32.mrb[0].mxu0
        %v955 = vadd.f32 0.0, %v954
        %v956 = vpop.f32.mrb[0].mxu0
        %v957 = vadd.f32 0.0, %v956
        %v958 = vpop.f32.mrb[0].mxu0
        %v959 = vadd.f32 0.0, %v958
        %960 = vmatprep.mubr.bf16.mxu0 0
        %961 = vmatmul.mubr.bf16.gmra.mrb[0].mxu0 %v679
        %v962 = vpop.f32.mrb[0].mxu0
        %v963 = vadd.f32 0.0, %v962
        %v964 = vpop.f32.mrb[0].mxu0
        %v965 = vadd.f32 0.0, %v964
        %v966 = vpop.f32.mrb[0].mxu0
        %v967 = vadd.f32 0.0, %v966
        %v968 = vpop.f32.mrb[0].mxu0
        %v969 = vadd.f32 0.0, %v968
        %970 = vmatprep.mubr.bf16.mxu0 0
        %971 = vmatmul.mubr.bf16.gmra.mrb[0].mxu0 %v682
        %v972 = vpop.f32.mrb[0].mxu0
        %v973 = vadd.f32 0.0, %v972
        %v974 = vpop.f32.mrb[0].mxu0
        %v975 = vadd.f32 0.0, %v974
        %v976 = vpop.f32.mrb[0].mxu0
        %v977 = vadd.f32 0.0, %v976
        %v978 = vpop.f32.mrb[0].mxu0
        %v979 = vadd.f32 0.0, %v978
        %980 = vmatprep.mubr.bf16.mxu0 0
        %981 = vmatmul.mubr.bf16.gmra.mrb[0].mxu0 %v685
        %v982 = vpop.f32.mrb[0].mxu0
        %v983 = vadd.f32 0.0, %v982
        %v984 = vpop.f32.mrb[0].mxu0
        %v985 = vadd.f32 0.0, %v984
        %v986 = vpop.f32.mrb[0].mxu0
        %v987 = vadd.f32 0.0, %v986
        %v988 = vpop.f32.mrb[0].mxu0
        %v989 = vadd.f32 0.0, %v988
        %990 = vmatprep.mubr.bf16.mxu0 0
        %991 = vmatmul.mubr.bf16.gmra.mrb[0].mxu0 %v688
        %v992 = vpop.f32.mrb[0].mxu0
        %v993 = vadd.f32 0.0, %v992
        %v994 = vpop.f32.mrb[0].mxu0
        %v995 = vadd.f32 0.0, %v994
        %v996 = vpop.f32.mrb[0].mxu0
        %v997 = vadd.f32 0.0, %v996
        %v998 = vpop.f32.mrb[0].mxu0
        %v999 = vadd.f32 0.0, %v998
        %1000 = vmatprep.mubr.bf16.mxu0 0
        %1001 = vmatmul.mubr.bf16.gmra.mrb[0].mxu0 %v691
        %v1002 = vpop.f32.mrb[0].mxu0
        %v1003 = vadd.f32 0.0, %v1002
        %v1004 = vpop.f32.mrb[0].mxu0
        %v1005 = vadd.f32 0.0, %v1004
        %v1006 = vpop.f32.mrb[0].mxu0
        %v1007 = vadd.f32 0.0, %v1006
        %v1008 = vpop.f32.mrb[0].mxu0
        %v1009 = vadd.f32 0.0, %v1008
        %1010 = vmatprep.mubr.bf16.mxu0 0
        %1011 = vmatmul.mubr.bf16.gmra.mrb[0].mxu0 %v694
        %v1012 = vpop.f32.mrb[0].mxu0
        %v1013 = vadd.f32 0.0, %v1012
        %v1014 = vpop.f32.mrb[0].mxu0
        %v1015 = vadd.f32 0.0, %v1014
        %v1016 = vpop.f32.mrb[0].mxu0
        %v1017 = vadd.f32 0.0, %v1016
        %v1018 = vpop.f32.mrb[0].mxu0
        %v1019 = vadd.f32 0.0, %v1018
        %1020 = vmatprep.mubr.bf16.mxu0 0
        %1021 = vmatmul.mubr.bf16.gmra.mrb[0].mxu0 %v697
        %v1022 = vpop.f32.mrb[0].mxu0
        %v1023 = vadd.f32 0.0, %v1022
        %v1024 = vpop.f32.mrb[0].mxu0
        %v1025 = vadd.f32 0.0, %v1024
        %v1026 = vpop.f32.mrb[0].mxu0
        %v1027 = vadd.f32 0.0, %v1026
        %v1028 = vpop.f32.mrb[0].mxu0
        %v1029 = vadd.f32 0.0, %v1028
        %1030 = vmatprep.mubr.bf16.mxu0 0
        %1031 = vmatmul.mubr.bf16.gmra.mrb[0].mxu0 %v700
        %v1032 = vpop.f32.mrb[0].mxu0
        %v1033 = vadd.f32 0.0, %v1032
        %v1034 = vpop.f32.mrb[0].mxu0
        %v1035 = vadd.f32 0.0, %v1034
        %v1036 = vpop.f32.mrb[0].mxu0
        %v1037 = vadd.f32 0.0, %v1036
        %v1038 = vpop.f32.mrb[0].mxu0
        %v1039 = vadd.f32 0.0, %v1038
        %1040 = vmatprep.mubr.bf16.mxu0 0
        %1041 = vmatmul.mubr.bf16.gmra.mrb[0].mxu0 %v703
        %v1042 = vpop.f32.mrb[0].mxu0
        %v1043 = vadd.f32 0.0, %v1042
        %v1044 = vpop.f32.mrb[0].mxu0
        %v1045 = vadd.f32 0.0, %v1044
        %v1046 = vpop.f32.mrb[0].mxu0
        %v1047 = vadd.f32 0.0, %v1046
        %v1048 = vpop.f32.mrb[0].mxu0
        %v1049 = vadd.f32 0.0, %v1048
        %1050 = vmatprep.mubr.bf16.mxu0 0
        %1051 = vmatmul.mubr.bf16.gmra.mrb[0].mxu0 %v706
        %v1052 = vpop.f32.mrb[0].mxu0
        %v1053 = vadd.f32 0.0, %v1052
        %v1054 = vpop.f32.mrb[0].mxu0
        %v1055 = vadd.f32 0.0, %v1054
        %v1056 = vpop.f32.mrb[0].mxu0
        %v1057 = vadd.f32 0.0, %v1056
        %v1058 = vpop.f32.mrb[0].mxu0
        %v1059 = vadd.f32 0.0, %v1058
        %1060 = vmatprep.mubr.bf16.mxu0 0
        %1061 = vmatmul.mubr.bf16.gmra.mrb[0].mxu0 %v709
        %v1062 = vpop.f32.mrb[0].mxu0
        %v1063 = vadd.f32 0.0, %v1062
        %v1064 = vpop.f32.mrb[0].mxu0
        %v1065 = vadd.f32 0.0, %v1064
        %v1066 = vpop.f32.mrb[0].mxu0
        %v1067 = vadd.f32 0.0, %v1066
        %v1068 = vpop.f32.mrb[0].mxu0
        %v1069 = vadd.f32 0.0, %v1068
        %1070 = vdwg.mxu0
        %v1071 = vmax.f32 %v753, %v763
        %v1072 = vmax.f32 %v757, %v767
        %v1073 = vmax.f32 %v1071, %v773
        %v1074 = vmax.f32 %v1072, %v777
        %v1075 = vmax.f32 %v1073, %v783
        %v1076 = vmax.f32 %v1074, %v787
        %v1077 = vmax.f32 %v1075, %v793
        %v1078 = vmax.f32 %v1076, %v797
        %v1079 = vmax.f32 %v1077, %v803
        %v1080 = vmax.f32 %v1078, %v807
        %v1081 = vmax.f32 %v1079, %v813
        %v1082 = vmax.f32 %v1080, %v817
        %v1083 = vmax.f32 %v1081, %v823
        %v1084 = vmax.f32 %v1082, %v827
        %v1085 = vmax.f32 %v1083, %v833
        %v1086 = vmax.f32 %v1084, %v837
        %v1087 = vmax.f32 %v1085, %v843
        %v1088 = vmax.f32 %v1086, %v847
        %v1089 = vmax.f32 %v1087, %v853
        %v1090 = vmax.f32 %v1088, %v857
        %v1091 = vmax.f32 %v1089, %v863
        %v1092 = vmax.f32 %v1090, %v867
        %v1093 = vmax.f32 %v1091, %v873
        %v1094 = vmax.f32 %v1092, %v877
        %v1095 = vmax.f32 %v1093, %v883
        %v1096 = vmax.f32 %v1094, %v887
        %v1097 = vmax.f32 %v1095, %v893
        %v1098 = vmax.f32 %v1096, %v897
        %v1099 = vmax.f32 %v1097, %v903
        %v1100 = vmax.f32 %v1098, %v907
        %v1101 = vmax.f32 %v1099, %v913
        %v1102 = vmax.f32 %v1100, %v917
        %v1103 = vmax.f32 %v1101, %v923
        %v1104 = vmax.f32 %v1102, %v927
        %v1105 = vmax.f32 %v1103, %v933
        %v1106 = vmax.f32 %v1104, %v937
        %v1107 = vmax.f32 %v1105, %v943
        %v1108 = vmax.f32 %v1106, %v947
        %v1109 = vmax.f32 %v1107, %v953
        %v1110 = vmax.f32 %v1108, %v957
        %v1111 = vmax.f32 %v1109, %v963
        %v1112 = vmax.f32 %v1110, %v967
        %v1113 = vmax.f32 %v1111, %v973
        %v1114 = vmax.f32 %v1112, %v977
        %v1115 = vmax.f32 %v1113, %v983
        %v1116 = vmax.f32 %v1114, %v987
        %v1117 = vmax.f32 %v1115, %v993
        %v1118 = vmax.f32 %v1116, %v997
        %v1119 = vmax.f32 %v1117, %v1003
        %v1120 = vmax.f32 %v1118, %v1007
        %v1121 = vmax.f32 %v1119, %v1013
        %v1122 = vmax.f32 %v1120, %v1017
        %v1123 = vmax.f32 %v1121, %v1023
        %v1124 = vmax.f32 %v1122, %v1027
        %v1125 = vmax.f32 %v1123, %v1033
        %v1126 = vmax.f32 %v1124, %v1037
        %v1127 = vmax.f32 %v1125, %v1043
        %v1128 = vmax.f32 %v1126, %v1047
        %v1129 = vmax.f32 %v1127, %v1053
        %v1130 = vmax.f32 %v1128, %v1057
        %v1131 = vmax.f32 %v1129, %v1063
        %v1132 = vmax.f32 %v1130, %v1067
        %v1133 = vmax.f32 %v1131, %v1132
        %v1134 = vrot.slane %v1133, 4
        %v1135 = vmax.f32 %v1133, %v1134
        %v1136 = vrot.slane %v1135, 2
        %v1137 = vmax.f32 %v1135, %v1136
        %v1138 = vrot.slane %v1137, 1
        %v1139 = vmax.f32 %v1137, %v1138
        %v1140 = vmax.f32 %v755, %v765
        %v1141 = vmax.f32 %v759, %v769
        %v1142 = vmax.f32 %v1140, %v775
        %v1143 = vmax.f32 %v1141, %v779
        %v1144 = vmax.f32 %v1142, %v785
        %v1145 = vmax.f32 %v1143, %v789
        %v1146 = vmax.f32 %v1144, %v795
        %v1147 = vmax.f32 %v1145, %v799
        %v1148 = vmax.f32 %v1146, %v805
        %v1149 = vmax.f32 %v1147, %v809
        %v1150 = vmax.f32 %v1148, %v815
        %v1151 = vmax.f32 %v1149, %v819
        %v1152 = vmax.f32 %v1150, %v825
        %v1153 = vmax.f32 %v1151, %v829
        %v1154 = vmax.f32 %v1152, %v835
        %v1155 = vmax.f32 %v1153, %v839
        %v1156 = vmax.f32 %v1154, %v845
        %v1157 = vmax.f32 %v1155, %v849
        %v1158 = vmax.f32 %v1156, %v855
        %v1159 = vmax.f32 %v1157, %v859
        %v1160 = vmax.f32 %v1158, %v865
        %v1161 = vmax.f32 %v1159, %v869
        %v1162 = vmax.f32 %v1160, %v875
        %v1163 = vmax.f32 %v1161, %v879
        %v1164 = vmax.f32 %v1162, %v885
        %v1165 = vmax.f32 %v1163, %v889
        %v1166 = vmax.f32 %v1164, %v895
        %v1167 = vmax.f32 %v1165, %v899
        %v1168 = vmax.f32 %v1166, %v905
        %v1169 = vmax.f32 %v1167, %v909
        %v1170 = vmax.f32 %v1168, %v915
        %v1171 = vmax.f32 %v1169, %v919
        %v1172 = vmax.f32 %v1170, %v925
        %v1173 = vmax.f32 %v1171, %v929
        %v1174 = vmax.f32 %v1172, %v935
        %v1175 = vmax.f32 %v1173, %v939
        %v1176 = vmax.f32 %v1174, %v945
        %v1177 = vmax.f32 %v1175, %v949
        %v1178 = vmax.f32 %v1176, %v955
        %v1179 = vmax.f32 %v1177, %v959
        %v1180 = vmax.f32 %v1178, %v965
        %v1181 = vmax.f32 %v1179, %v969
        %v1182 = vmax.f32 %v1180, %v975
        %v1183 = vmax.f32 %v1181, %v979
        %v1184 = vmax.f32 %v1182, %v985
        %v1185 = vmax.f32 %v1183, %v989
        %v1186 = vmax.f32 %v1184, %v995
        %v1187 = vmax.f32 %v1185, %v999
        %v1188 = vmax.f32 %v1186, %v1005
        %v1189 = vmax.f32 %v1187, %v1009
        %v1190 = vmax.f32 %v1188, %v1015
        %v1191 = vmax.f32 %v1189, %v1019
        %v1192 = vmax.f32 %v1190, %v1025
        %v1193 = vmax.f32 %v1191, %v1029
        %v1194 = vmax.f32 %v1192, %v1035
        %v1195 = vmax.f32 %v1193, %v1039
        %v1196 = vmax.f32 %v1194, %v1045
        %v1197 = vmax.f32 %v1195, %v1049
        %v1198 = vmax.f32 %v1196, %v1055
        %v1199 = vmax.f32 %v1197, %v1059
        %v1200 = vmax.f32 %v1198, %v1065
        %v1201 = vmax.f32 %v1199, %v1069
        %v1202 = vmax.f32 %v1200, %v1201
        %v1203 = vrot.slane %v1202, 4
        %v1204 = vmax.f32 %v1202, %v1203
        %v1205 = vrot.slane %v1204, 2
        %v1206 = vmax.f32 %v1204, %v1205
        %v1207 = vrot.slane %v1206, 1
        %v1208 = vmax.f32 %v1206, %v1207
        %v1209 = vsub.f32 %v753, %v1139
        %v1210 = vsub.f32 %v755, %v1208
        %v1211 = vsub.f32 %v757, %v1139
        %v1212 = vsub.f32 %v759, %v1208
        %v1213 = vsub.f32 %v763, %v1139
        %v1214 = vsub.f32 %v765, %v1208
        %v1215 = vsub.f32 %v767, %v1139
        %v1216 = vsub.f32 %v769, %v1208
        %v1217 = vsub.f32 %v773, %v1139
        %v1218 = vsub.f32 %v775, %v1208
        %v1219 = vsub.f32 %v777, %v1139
        %v1220 = vsub.f32 %v779, %v1208
        %v1221 = vsub.f32 %v783, %v1139
        %v1222 = vsub.f32 %v785, %v1208
        %v1223 = vsub.f32 %v787, %v1139
        %v1224 = vsub.f32 %v789, %v1208
        %v1225 = vsub.f32 %v793, %v1139
        %v1226 = vsub.f32 %v795, %v1208
        %v1227 = vsub.f32 %v797, %v1139
        %v1228 = vsub.f32 %v799, %v1208
        %v1229 = vsub.f32 %v803, %v1139
        %v1230 = vsub.f32 %v805, %v1208
        %v1231 = vsub.f32 %v807, %v1139
        %v1232 = vsub.f32 %v809, %v1208
        %v1233 = vsub.f32 %v813, %v1139
        %v1234 = vsub.f32 %v815, %v1208
        %v1235 = vsub.f32 %v817, %v1139
        %v1236 = vsub.f32 %v819, %v1208
        %v1237 = vsub.f32 %v823, %v1139
        %v1238 = vsub.f32 %v825, %v1208
        %v1239 = vsub.f32 %v827, %v1139
        %v1240 = vsub.f32 %v829, %v1208
        %v1241 = vsub.f32 %v833, %v1139
        %v1242 = vsub.f32 %v835, %v1208
        %v1243 = vsub.f32 %v837, %v1139
        %v1244 = vsub.f32 %v839, %v1208
        %v1245 = vsub.f32 %v843, %v1139
        %v1246 = vsub.f32 %v845, %v1208
        %v1247 = vsub.f32 %v847, %v1139
        %v1248 = vsub.f32 %v849, %v1208
        %v1249 = vsub.f32 %v853, %v1139
        %v1250 = vsub.f32 %v855, %v1208
        %v1251 = vsub.f32 %v857, %v1139
        %v1252 = vsub.f32 %v859, %v1208
        %v1253 = vsub.f32 %v863, %v1139
        %v1254 = vsub.f32 %v865, %v1208
        %v1255 = vsub.f32 %v867, %v1139
        %v1256 = vsub.f32 %v869, %v1208
        %v1257 = vsub.f32 %v873, %v1139
        %v1258 = vsub.f32 %v875, %v1208
        %v1259 = vsub.f32 %v877, %v1139
        %v1260 = vsub.f32 %v879, %v1208
        %v1261 = vsub.f32 %v883, %v1139
        %v1262 = vsub.f32 %v885, %v1208
        %v1263 = vsub.f32 %v887, %v1139
        %v1264 = vsub.f32 %v889, %v1208
        %v1265 = vsub.f32 %v893, %v1139
        %v1266 = vsub.f32 %v895, %v1208
        %v1267 = vsub.f32 %v897, %v1139
        %v1268 = vsub.f32 %v899, %v1208
        %v1269 = vsub.f32 %v903, %v1139
        %v1270 = vsub.f32 %v905, %v1208
        %v1271 = vsub.f32 %v907, %v1139
        %v1272 = vsub.f32 %v909, %v1208
        %v1273 = vsub.f32 %v913, %v1139
        %v1274 = vsub.f32 %v915, %v1208
        %v1275 = vsub.f32 %v917, %v1139
        %v1276 = vsub.f32 %v919, %v1208
        %v1277 = vsub.f32 %v923, %v1139
        %v1278 = vsub.f32 %v925, %v1208
        %v1279 = vsub.f32 %v927, %v1139
        %v1280 = vsub.f32 %v929, %v1208
        %v1281 = vsub.f32 %v933, %v1139
        %v1282 = vsub.f32 %v935, %v1208
        %v1283 = vsub.f32 %v937, %v1139
        %v1284 = vsub.f32 %v939, %v1208
        %v1285 = vsub.f32 %v943, %v1139
        %v1286 = vsub.f32 %v945, %v1208
        %v1287 = vsub.f32 %v947, %v1139
        %v1288 = vsub.f32 %v949, %v1208
        %v1289 = vsub.f32 %v953, %v1139
        %v1290 = vsub.f32 %v955, %v1208
        %v1291 = vsub.f32 %v957, %v1139
        %v1292 = vsub.f32 %v959, %v1208
        %v1293 = vsub.f32 %v963, %v1139
        %v1294 = vsub.f32 %v965, %v1208
        %v1295 = vsub.f32 %v967, %v1139
        %v1296 = vsub.f32 %v969, %v1208
        %v1297 = vsub.f32 %v973, %v1139
        %v1298 = vsub.f32 %v975, %v1208
        %v1299 = vsub.f32 %v977, %v1139
        %v1300 = vsub.f32 %v979, %v1208
        %v1301 = vsub.f32 %v983, %v1139
        %v1302 = vsub.f32 %v985, %v1208
        %v1303 = vsub.f32 %v987, %v1139
        %v1304 = vsub.f32 %v989, %v1208
        %v1305 = vsub.f32 %v993, %v1139
        %v1306 = vsub.f32 %v995, %v1208
        %v1307 = vsub.f32 %v997, %v1139
        %v1308 = vsub.f32 %v999, %v1208
        %v1309 = vsub.f32 %v1003, %v1139
        %v1310 = vsub.f32 %v1005, %v1208
        %v1311 = vsub.f32 %v1007, %v1139
        %v1312 = vsub.f32 %v1009, %v1208
        %v1313 = vsub.f32 %v1013, %v1139
        %v1314 = vsub.f32 %v1015, %v1208
        %v1315 = vsub.f32 %v1017, %v1139
        %v1316 = vsub.f32 %v1019, %v1208
        %v1317 = vsub.f32 %v1023, %v1139
        %v1318 = vsub.f32 %v1025, %v1208
        %v1319 = vsub.f32 %v1027, %v1139
        %v1320 = vsub.f32 %v1029, %v1208
        %v1321 = vsub.f32 %v1033, %v1139
        %v1322 = vsub.f32 %v1035, %v1208
        %v1323 = vsub.f32 %v1037, %v1139
        %v1324 = vsub.f32 %v1039, %v1208
        %v1325 = vsub.f32 %v1043, %v1139
        %v1326 = vsub.f32 %v1045, %v1208
        %v1327 = vsub.f32 %v1047, %v1139
        %v1328 = vsub.f32 %v1049, %v1208
        %v1329 = vsub.f32 %v1053, %v1139
        %v1330 = vsub.f32 %v1055, %v1208
        %v1331 = vsub.f32 %v1057, %v1139
        %v1332 = vsub.f32 %v1059, %v1208
        %v1333 = vsub.f32 %v1063, %v1139
        %v1334 = vsub.f32 %v1065, %v1208
        %v1335 = vsub.f32 %v1067, %v1139
        %v1336 = vsub.f32 %v1069, %v1208
        %v1337 = vmul.f32 %v1209, 1.442695
        %v1338 = vpow.pop %v1337
        %v1339 = vmul.f32 %v1210, 1.442695
        %v1340 = vpow.pop %v1339
        %v1341 = vmul.f32 %v1211, 1.442695
        %v1342 = vpow.pop %v1341
        %v1343 = vmul.f32 %v1212, 1.442695
        %v1344 = vpow.pop %v1343
        %v1345 = vmul.f32 %v1213, 1.442695
        %v1346 = vpow.pop %v1345
        %v1347 = vmul.f32 %v1214, 1.442695
        %v1348 = vpow.pop %v1347
        %v1349 = vmul.f32 %v1215, 1.442695
        %v1350 = vpow.pop %v1349
        %v1351 = vmul.f32 %v1216, 1.442695
        %v1352 = vpow.pop %v1351
        %v1353 = vmul.f32 %v1217, 1.442695
        %v1354 = vpow.pop %v1353
        %v1355 = vmul.f32 %v1218, 1.442695
        %v1356 = vpow.pop %v1355
        %v1357 = vmul.f32 %v1219, 1.442695
        %v1358 = vpow.pop %v1357
        %v1359 = vmul.f32 %v1220, 1.442695
        %v1360 = vpow.pop %v1359
        %v1361 = vmul.f32 %v1221, 1.442695
        %v1362 = vpow.pop %v1361
        %v1363 = vmul.f32 %v1222, 1.442695
        %v1364 = vpow.pop %v1363
        %v1365 = vmul.f32 %v1223, 1.442695
        %v1366 = vpow.pop %v1365
        %v1367 = vmul.f32 %v1224, 1.442695
        %v1368 = vpow.pop %v1367
        %v1369 = vmul.f32 %v1225, 1.442695
        %v1370 = vpow.pop %v1369
        %v1371 = vmul.f32 %v1226, 1.442695
        %v1372 = vpow.pop %v1371
        %v1373 = vmul.f32 %v1227, 1.442695
        %v1374 = vpow.pop %v1373
        %v1375 = vmul.f32 %v1228, 1.442695
        %v1376 = vpow.pop %v1375
        %v1377 = vmul.f32 %v1229, 1.442695
        %v1378 = vpow.pop %v1377
        %v1379 = vmul.f32 %v1230, 1.442695
        %v1380 = vpow.pop %v1379
        %v1381 = vmul.f32 %v1231, 1.442695
        %v1382 = vpow.pop %v1381
        %v1383 = vmul.f32 %v1232, 1.442695
        %v1384 = vpow.pop %v1383
        %v1385 = vmul.f32 %v1233, 1.442695
        %v1386 = vpow.pop %v1385
        %v1387 = vmul.f32 %v1234, 1.442695
        %v1388 = vpow.pop %v1387
        %v1389 = vmul.f32 %v1235, 1.442695
        %v1390 = vpow.pop %v1389
        %v1391 = vmul.f32 %v1236, 1.442695
        %v1392 = vpow.pop %v1391
        %v1393 = vmul.f32 %v1237, 1.442695
        %v1394 = vpow.pop %v1393
        %v1395 = vmul.f32 %v1238, 1.442695
        %v1396 = vpow.pop %v1395
        %v1397 = vmul.f32 %v1239, 1.442695
        %v1398 = vpow.pop %v1397
        %v1399 = vmul.f32 %v1240, 1.442695
        %v1400 = vpow.pop %v1399
        %v1401 = vmul.f32 %v1241, 1.442695
        %v1402 = vpow.pop %v1401
        %v1403 = vmul.f32 %v1242, 1.442695
        %v1404 = vpow.pop %v1403
        %v1405 = vmul.f32 %v1243, 1.442695
        %v1406 = vpow.pop %v1405
        %v1407 = vmul.f32 %v1244, 1.442695
        %v1408 = vpow.pop %v1407
        %v1409 = vmul.f32 %v1245, 1.442695
        %v1410 = vpow.pop %v1409
        %v1411 = vmul.f32 %v1246, 1.442695
        %v1412 = vpow.pop %v1411
        %v1413 = vmul.f32 %v1247, 1.442695
        %v1414 = vpow.pop %v1413
        %v1415 = vmul.f32 %v1248, 1.442695
        %v1416 = vpow.pop %v1415
        %v1417 = vmul.f32 %v1249, 1.442695
        %v1418 = vpow.pop %v1417
        %v1419 = vmul.f32 %v1250, 1.442695
        %v1420 = vpow.pop %v1419
        %v1421 = vmul.f32 %v1251, 1.442695
        %v1422 = vpow.pop %v1421
        %v1423 = vmul.f32 %v1252, 1.442695
        %v1424 = vpow.pop %v1423
        %v1425 = vmul.f32 %v1253, 1.442695
        %v1426 = vpow.pop %v1425
        %v1427 = vmul.f32 %v1254, 1.442695
        %v1428 = vpow.pop %v1427
        %v1429 = vmul.f32 %v1255, 1.442695
        %v1430 = vpow.pop %v1429
        %v1431 = vmul.f32 %v1256, 1.442695
        %v1432 = vpow.pop %v1431
        %v1433 = vmul.f32 %v1257, 1.442695
        %v1434 = vpow.pop %v1433
        %v1435 = vmul.f32 %v1258, 1.442695
        %v1436 = vpow.pop %v1435
        %v1437 = vmul.f32 %v1259, 1.442695
        %v1438 = vpow.pop %v1437
        %v1439 = vmul.f32 %v1260, 1.442695
        %v1440 = vpow.pop %v1439
        %v1441 = vmul.f32 %v1261, 1.442695
        %v1442 = vpow.pop %v1441
        %v1443 = vmul.f32 %v1262, 1.442695
        %v1444 = vpow.pop %v1443
        %v1445 = vmul.f32 %v1263, 1.442695
        %v1446 = vpow.pop %v1445
        %v1447 = vmul.f32 %v1264, 1.442695
        %v1448 = vpow.pop %v1447
        %v1449 = vmul.f32 %v1265, 1.442695
        %v1450 = vpow.pop %v1449
        %v1451 = vmul.f32 %v1266, 1.442695
        %v1452 = vpow.pop %v1451
        %v1453 = vmul.f32 %v1267, 1.442695
        %v1454 = vpow.pop %v1453
        %v1455 = vmul.f32 %v1268, 1.442695
        %v1456 = vpow.pop %v1455
        %v1457 = vmul.f32 %v1269, 1.442695
        %v1458 = vpow.pop %v1457
        %v1459 = vmul.f32 %v1270, 1.442695
        %v1460 = vpow.pop %v1459
        %v1461 = vmul.f32 %v1271, 1.442695
        %v1462 = vpow.pop %v1461
        %v1463 = vmul.f32 %v1272, 1.442695
        %v1464 = vpow.pop %v1463
        %v1465 = vmul.f32 %v1273, 1.442695
        %v1466 = vpow.pop %v1465
        %v1467 = vmul.f32 %v1274, 1.442695
        %v1468 = vpow.pop %v1467
        %v1469 = vmul.f32 %v1275, 1.442695
        %v1470 = vpow.pop %v1469
        %v1471 = vmul.f32 %v1276, 1.442695
        %v1472 = vpow.pop %v1471
        %v1473 = vmul.f32 %v1277, 1.442695
        %v1474 = vpow.pop %v1473
        %v1475 = vmul.f32 %v1278, 1.442695
        %v1476 = vpow.pop %v1475
        %v1477 = vmul.f32 %v1279, 1.442695
        %v1478 = vpow.pop %v1477
        %v1479 = vmul.f32 %v1280, 1.442695
        %v1480 = vpow.pop %v1479
        %v1481 = vmul.f32 %v1281, 1.442695
        %v1482 = vpow.pop %v1481
        %v1483 = vmul.f32 %v1282, 1.442695
        %v1484 = vpow.pop %v1483
        %v1485 = vmul.f32 %v1283, 1.442695
        %v1486 = vpow.pop %v1485
        %v1487 = vmul.f32 %v1284, 1.442695
        %v1488 = vpow.pop %v1487
        %v1489 = vmul.f32 %v1285, 1.442695
        %v1490 = vpow.pop %v1489
        %v1491 = vmul.f32 %v1286, 1.442695
        %v1492 = vpow.pop %v1491
        %v1493 = vmul.f32 %v1287, 1.442695
        %v1494 = vpow.pop %v1493
        %v1495 = vmul.f32 %v1288, 1.442695
        %v1496 = vpow.pop %v1495
        %v1497 = vmul.f32 %v1289, 1.442695
        %v1498 = vpow.pop %v1497
        %v1499 = vmul.f32 %v1290, 1.442695
        %v1500 = vpow.pop %v1499
        %v1501 = vmul.f32 %v1291, 1.442695
        %v1502 = vpow.pop %v1501
        %v1503 = vmul.f32 %v1292, 1.442695
        %v1504 = vpow.pop %v1503
        %v1505 = vmul.f32 %v1293, 1.442695
        %v1506 = vpow.pop %v1505
        %v1507 = vmul.f32 %v1294, 1.442695
        %v1508 = vpow.pop %v1507
        %v1509 = vmul.f32 %v1295, 1.442695
        %v1510 = vpow.pop %v1509
        %v1511 = vmul.f32 %v1296, 1.442695
        %v1512 = vpow.pop %v1511
        %v1513 = vmul.f32 %v1297, 1.442695
        %v1514 = vpow.pop %v1513
        %v1515 = vmul.f32 %v1298, 1.442695
        %v1516 = vpow.pop %v1515
        %v1517 = vmul.f32 %v1299, 1.442695
        %v1518 = vpow.pop %v1517
        %v1519 = vmul.f32 %v1300, 1.442695
        %v1520 = vpow.pop %v1519
        %v1521 = vmul.f32 %v1301, 1.442695
        %v1522 = vpow.pop %v1521
        %v1523 = vmul.f32 %v1302, 1.442695
        %v1524 = vpow.pop %v1523
        %v1525 = vmul.f32 %v1303, 1.442695
        %v1526 = vpow.pop %v1525
        %v1527 = vmul.f32 %v1304, 1.442695
        %v1528 = vpow.pop %v1527
        %v1529 = vmul.f32 %v1305, 1.442695
        %v1530 = vpow.pop %v1529
        %v1531 = vmul.f32 %v1306, 1.442695
        %v1532 = vpow.pop %v1531
        %v1533 = vmul.f32 %v1307, 1.442695
        %v1534 = vpow.pop %v1533
        %v1535 = vmul.f32 %v1308, 1.442695
        %v1536 = vpow.pop %v1535
        %v1537 = vmul.f32 %v1309, 1.442695
        %v1538 = vpow.pop %v1537
        %v1539 = vmul.f32 %v1310, 1.442695
        %v1540 = vpow.pop %v1539
        %v1541 = vmul.f32 %v1311, 1.442695
        %v1542 = vpow.pop %v1541
        %v1543 = vmul.f32 %v1312, 1.442695
        %v1544 = vpow.pop %v1543
        %v1545 = vmul.f32 %v1313, 1.442695
        %v1546 = vpow.pop %v1545
        %v1547 = vmul.f32 %v1314, 1.442695
        %v1548 = vpow.pop %v1547
        %v1549 = vmul.f32 %v1315, 1.442695
        %v1550 = vpow.pop %v1549
        %v1551 = vmul.f32 %v1316, 1.442695
        %v1552 = vpow.pop %v1551
        %v1553 = vmul.f32 %v1317, 1.442695
        %v1554 = vpow.pop %v1553
        %v1555 = vmul.f32 %v1318, 1.442695
        %v1556 = vpow.pop %v1555
        %v1557 = vmul.f32 %v1319, 1.442695
        %v1558 = vpow.pop %v1557
        %v1559 = vmul.f32 %v1320, 1.442695
        %v1560 = vpow.pop %v1559
        %v1561 = vmul.f32 %v1321, 1.442695
        %v1562 = vpow.pop %v1561
        %v1563 = vmul.f32 %v1322, 1.442695
        %v1564 = vpow.pop %v1563
        %v1565 = vmul.f32 %v1323, 1.442695
        %v1566 = vpow.pop %v1565
        %v1567 = vmul.f32 %v1324, 1.442695
        %v1568 = vpow.pop %v1567
        %v1569 = vmul.f32 %v1325, 1.442695
        %v1570 = vpow.pop %v1569
        %v1571 = vmul.f32 %v1326, 1.442695
        %v1572 = vpow.pop %v1571
        %v1573 = vmul.f32 %v1327, 1.442695
        %v1574 = vpow.pop %v1573
        %v1575 = vmul.f32 %v1328, 1.442695
        %v1576 = vpow.pop %v1575
        %v1577 = vmul.f32 %v1329, 1.442695
        %v1578 = vpow.pop %v1577
        %v1579 = vmul.f32 %v1330, 1.442695
        %v1580 = vpow.pop %v1579
        %v1581 = vmul.f32 %v1331, 1.442695
        %v1582 = vpow.pop %v1581
        %v1583 = vmul.f32 %v1332, 1.442695
        %v1584 = vpow.pop %v1583
        %v1585 = vmul.f32 %v1333, 1.442695
        %v1586 = vpow.pop %v1585
        %v1587 = vmul.f32 %v1334, 1.442695
        %v1588 = vpow.pop %v1587
        %v1589 = vmul.f32 %v1335, 1.442695
        %v1590 = vpow.pop %v1589
        %v1591 = vmul.f32 %v1336, 1.442695
        %v1592 = vpow.pop %v1591
        %v1593 = vpack.c.bf16 %v1342, %v1338
        %v1594 = vpack.c.bf16 %v1344, %v1340
        %v1595 = vpack.c.bf16 %v1350, %v1346
        %v1596 = vpack.c.bf16 %v1352, %v1348
        %v1597 = vpack.c.bf16 %v1358, %v1354
        %v1598 = vpack.c.bf16 %v1360, %v1356
        %v1599 = vpack.c.bf16 %v1366, %v1362
        %v1600 = vpack.c.bf16 %v1368, %v1364
        %v1601 = vpack.c.bf16 %v1374, %v1370
        %v1602 = vpack.c.bf16 %v1376, %v1372
        %v1603 = vpack.c.bf16 %v1382, %v1378
        %v1604 = vpack.c.bf16 %v1384, %v1380
        %v1605 = vpack.c.bf16 %v1390, %v1386
        %v1606 = vpack.c.bf16 %v1392, %v1388
        %v1607 = vpack.c.bf16 %v1398, %v1394
        %v1608 = vpack.c.bf16 %v1400, %v1396
        %v1609 = vpack.c.bf16 %v1406, %v1402
        %v1610 = vpack.c.bf16 %v1408, %v1404
        %v1611 = vpack.c.bf16 %v1414, %v1410
        %v1612 = vpack.c.bf16 %v1416, %v1412
        %v1613 = vpack.c.bf16 %v1422, %v1418
        %v1614 = vpack.c.bf16 %v1424, %v1420
        %v1615 = vpack.c.bf16 %v1430, %v1426
        %v1616 = vpack.c.bf16 %v1432, %v1428
        %v1617 = vpack.c.bf16 %v1438, %v1434
        %v1618 = vpack.c.bf16 %v1440, %v1436
        %v1619 = vpack.c.bf16 %v1446, %v1442
        %v1620 = vpack.c.bf16 %v1448, %v1444
        %v1621 = vpack.c.bf16 %v1454, %v1450
        %v1622 = vpack.c.bf16 %v1456, %v1452
        %v1623 = vpack.c.bf16 %v1462, %v1458
        %v1624 = vpack.c.bf16 %v1464, %v1460
        %v1625 = vpack.c.bf16 %v1470, %v1466
        %v1626 = vpack.c.bf16 %v1472, %v1468
        %v1627 = vpack.c.bf16 %v1478, %v1474
        %v1628 = vpack.c.bf16 %v1480, %v1476
        %v1629 = vpack.c.bf16 %v1486, %v1482
        %v1630 = vpack.c.bf16 %v1488, %v1484
        %v1631 = vpack.c.bf16 %v1494, %v1490
        %v1632 = vpack.c.bf16 %v1496, %v1492
        %v1633 = vpack.c.bf16 %v1502, %v1498
        %v1634 = vpack.c.bf16 %v1504, %v1500
        %v1635 = vpack.c.bf16 %v1510, %v1506
        %v1636 = vpack.c.bf16 %v1512, %v1508
        %v1637 = vpack.c.bf16 %v1518, %v1514
        %v1638 = vpack.c.bf16 %v1520, %v1516
        %v1639 = vpack.c.bf16 %v1526, %v1522
        %v1640 = vpack.c.bf16 %v1528, %v1524
        %v1641 = vpack.c.bf16 %v1534, %v1530
        %v1642 = vpack.c.bf16 %v1536, %v1532
        %v1643 = vpack.c.bf16 %v1542, %v1538
        %v1644 = vpack.c.bf16 %v1544, %v1540
        %v1645 = vpack.c.bf16 %v1550, %v1546
        %v1646 = vpack.c.bf16 %v1552, %v1548
        %v1647 = vpack.c.bf16 %v1558, %v1554
        %v1648 = vpack.c.bf16 %v1560, %v1556
        %v1649 = vpack.c.bf16 %v1566, %v1562
        %v1650 = vpack.c.bf16 %v1568, %v1564
        %v1651 = vpack.c.bf16 %v1574, %v1570
        %v1652 = vpack.c.bf16 %v1576, %v1572
        %v1653 = vpack.c.bf16 %v1582, %v1578
        %v1654 = vpack.c.bf16 %v1584, %v1580
        %v1655 = vpack.c.bf16 %v1590, %v1586
        %v1656 = vpack.c.bf16 %v1592, %v1588
        %v1657 = vpack.c.bf16 %v384, %v378
        %v1658 = vpack.c.bf16 %v386, %v380
        %v1659 = vpack.c.bf16 %v461, %v455
        %v1660 = vpack.c.bf16 %v463, %v457
        %v1665 = vrot.slane %v1657, 2
        %v1666 = vrot.slane %v1658, 2
        %v1667 = vrot.slane %v1659, 2
        %v1668 = vrot.slane %v1660, 2
        %1673 = vmatprep.subr.bf16.mxu0 %v1594
        %1674 = vmatpush1.bf16.msra.mxu0 %v1593
        %1675 = vmatprep.subr.bf16.mxu0 %v1596
        %1676 = vmatpush1.bf16.msra.mxu0 %v1595
        %1677 = vmatprep.subr.bf16.mxu0 %v1598
        %1678 = vmatpush1.bf16.msra.mxu0 %v1597
        %1679 = vmatprep.subr.bf16.mxu0 %v1600
        %1680 = vmatpush1.bf16.msra.mxu0 %v1599
        %1681 = vmatprep.subr.bf16.mxu0 %v1602
        %1682 = vmatpush1.bf16.msra.mxu0 %v1601
        %1683 = vmatprep.subr.bf16.mxu0 %v1604
        %1684 = vmatpush1.bf16.msra.mxu0 %v1603
        %1685 = vmatprep.subr.bf16.mxu0 %v1606
        %1686 = vmatpush1.bf16.msra.mxu0 %v1605
        %1687 = vmatprep.subr.bf16.mxu0 %v1608
        %1688 = vmatpush1.bf16.msra.mxu0 %v1607
        %1689 = vmatprep.subr.bf16.mxu0 %v1610
        %1690 = vmatpush1.bf16.msra.mxu0 %v1609
        %1691 = vmatprep.subr.bf16.mxu0 %v1612
        %1692 = vmatpush1.bf16.msra.mxu0 %v1611
        %1693 = vmatprep.subr.bf16.mxu0 %v1614
        %1694 = vmatpush1.bf16.msra.mxu0 %v1613
        %1695 = vmatprep.subr.bf16.mxu0 %v1616
        %1696 = vmatpush1.bf16.msra.mxu0 %v1615
        %1697 = vmatprep.subr.bf16.mxu0 %v1618
        %1698 = vmatpush1.bf16.msra.mxu0 %v1617
        %1699 = vmatprep.subr.bf16.mxu0 %v1620
        %1700 = vmatpush1.bf16.msra.mxu0 %v1619
        %1701 = vmatprep.subr.bf16.mxu0 %v1622
        %1702 = vmatpush1.bf16.msra.mxu0 %v1621
        %1703 = vmatprep.subr.bf16.mxu0 %v1624
        %1704 = vmatpush1.bf16.msra.mxu0 %v1623
        %1705 = vmatprep.mubr.bf16.mxu0 %v1666
        %1706 = vmatmul.mubr.bf16.gmra.mrb[0].mxu0 %v1665
        %v1707 = vpop.f32.mrb[0].mxu0
        %v1708 = vadd.f32 0.0, %v1707
        %v1709 = vpop.f32.mrb[0].mxu0
        %v1710 = vadd.f32 0.0, %v1709
        %v1711 = vpop.f32.mrb[0].mxu0
        %v1712 = vpop.f32.mrb[0].mxu0
        %1713 = vdwg.mxu0
        %1714 = vmatprep.subr.bf16.mxu0 %v1626
        %1715 = vmatpush1.bf16.msra.mxu0 %v1625
        %1716 = vmatprep.subr.bf16.mxu0 %v1628
        %1717 = vmatpush1.bf16.msra.mxu0 %v1627
        %1718 = vmatprep.subr.bf16.mxu0 %v1630
        %1719 = vmatpush1.bf16.msra.mxu0 %v1629
        %1720 = vmatprep.subr.bf16.mxu0 %v1632
        %1721 = vmatpush1.bf16.msra.mxu0 %v1631
        %1722 = vmatprep.subr.bf16.mxu0 %v1634
        %1723 = vmatpush1.bf16.msra.mxu0 %v1633
        %1724 = vmatprep.subr.bf16.mxu0 %v1636
        %1725 = vmatpush1.bf16.msra.mxu0 %v1635
        %1726 = vmatprep.subr.bf16.mxu0 %v1638
        %1727 = vmatpush1.bf16.msra.mxu0 %v1637
        %1728 = vmatprep.subr.bf16.mxu0 %v1640
        %1729 = vmatpush1.bf16.msra.mxu0 %v1639
        %1730 = vmatprep.subr.bf16.mxu0 %v1642
        %1731 = vmatpush1.bf16.msra.mxu0 %v1641
        %1732 = vmatprep.subr.bf16.mxu0 %v1644
        %1733 = vmatpush1.bf16.msra.mxu0 %v1643
        %1734 = vmatprep.subr.bf16.mxu0 %v1646
        %1735 = vmatpush1.bf16.msra.mxu0 %v1645
        %1736 = vmatprep.subr.bf16.mxu0 %v1648
        %1737 = vmatpush1.bf16.msra.mxu0 %v1647
        %1738 = vmatprep.subr.bf16.mxu0 %v1650
        %1739 = vmatpush1.bf16.msra.mxu0 %v1649
        %1740 = vmatprep.subr.bf16.mxu0 %v1652
        %1741 = vmatpush1.bf16.msra.mxu0 %v1651
        %1742 = vmatprep.subr.bf16.mxu0 %v1654
        %1743 = vmatpush1.bf16.msra.mxu0 %v1653
        %1744 = vmatprep.subr.bf16.mxu0 %v1656
        %1745 = vmatpush1.bf16.msra.mxu0 %v1655
        %1746 = vmatprep.mubr.bf16.mxu0 %v1668
        %1747 = vmatmul.mubr.bf16.gmra.mrb[0].mxu0 %v1667
        %v1748 = vpop.f32.mrb[0].mxu0
        %v1749 = vadd.f32 %v1708, %v1748
        %v1750 = vpop.f32.mrb[0].mxu0
        %v1751 = vadd.f32 %v1710, %v1750
        %v1752 = vpop.f32.mrb[0].mxu0
        %v1753 = vpop.f32.mrb[0].mxu0
        %1754 = vdwg.mxu0
        %v1755 = vrcp.pop %v1749
        %v1756 = vrcp.pop %v1751
        %v1757 = vmul.f32 %v1749, %v1755
        %v1758 = vmul.f32 %v1751, %v1756
        %v1759 = vsub.f32 2.0, %v1757
        %v1760 = vsub.f32 2.0, %v1758
        %v1761 = vmul.f32 %v1755, %v1759
        %v1762 = vmul.f32 %v1756, %v1760
        %v1763 = vlaneseq
        %v1764 = vshrl.u32 %v1763, 7
        %v1765 = vsub.s32 4, %v1764
        %v1766 = vrot.slane %v1761, %v1765
        %v1767 = vlaneseq
        %v1768 = vshrl.u32 %v1767, 7
        %v1769 = vsub.s32 4, %v1768
        %v1770 = vrot.slane %v1762, %v1769
        %v1771 = vmul.f32 %v1749, %v1766
        %v1772 = vmul.f32 %v1751, %v1770
        %s1773 = sld [smem:[#allocation3]]
        %v1774 = vstv %s1773
        %v1775 = vmul.f32 %v1774, %v1771
        %v1776 = vmul.f32 %v1774, %v1772
        %v1779 = vcombine.low %v1775, %v1776
        %v1781 = vadd.f32 %v268, %v1779
        %1782 = vst [vmem:[%s255] sm:$0xff] %v1781
        %s1783 = sand.u32 %s141, 1
        %s1784 = scalar_lea.sflag [#allocation6], %s1783
        %s1785 = sand.u32 %s141, 1
        %s1786 = smul.addr %s1785, 8
        %s1787 = scalar_lea.vmem [#allocation7], %s1786
        // Predicated region
        $region41: #{tpu_custom_call.1} parent=35 // pred_check
          %p1788 = pneg %p151
        $region42: #{tpu_custom_call.1} parent=35 // pred_check_branch
          %1790 = sbr.rel (%p1788) target = $region44
        $region43: #{tpu_custom_call.1} parent=35 // pred_region
          %s1791 = smul.u32 2, %s28
          %s1793 = ssub.s32 128, 128
          %1794 = vsyncadd %s1784, %s1793
          %s1795 = smul.addr %s27, 4
          %s1796 = sadd.s32 %s1791, %s1795
          %s1797 = smul.addr %s1796, 64
          %s1798 = scalar_lea.hbm %s5, %s1797
          %s1800 = sshll.u32 %s1787, 4
          %s1801 = int_to_ptr.vmem [resolvable:$true] %s1800
          %1803 = dma.vmem_to_hbm [thread:$0]  %s1801, 128, %s1798, %s1784
        $region44: #{tpu_custom_call.1} parent=35 // pred_fallthru
          _
      $region36: #{tpu_custom_call.1} parent=5 // pred_fallthru
        _
      %p1804 = scmp.le.s32.totalorder 2, %s18
      // Predicated region
      $region45: #{tpu_custom_call.1} parent=5 // pred_check
        %p1805 = pneg %p1804
      $region46: #{tpu_custom_call.1} parent=5 // pred_check_branch
        %1807 = sbr.rel (%p1805) target = $region48
      $region47: #{tpu_custom_call.1} parent=5 // pred_region
        %s1808 = ssub.s32 %s18, 2
        // Predicated region
        $region49: #{tpu_custom_call.1} parent=47 // pred_check
          %p1809 = pneg %p157
        $region50: #{tpu_custom_call.1} parent=47 // pred_check_branch
          %1811 = sbr.rel (%p1809) target = $region52
        $region51: #{tpu_custom_call.1} parent=47 // pred_region
          %s1812 = sand.u32 %s142, 1
          %s1813 = scalar_lea.sflag [#allocation6], %s1812
          %s1814 = sand.u32 %s142, 1
          %s1815 = smul.addr %s1814, 8
          %s1816 = scalar_lea.vmem [#allocation7], %s1815
          %1817 = dma.done %s1813, 128
        $region52: #{tpu_custom_call.1} parent=47 // pred_fallthru
          _
      $region48: #{tpu_custom_call.1} parent=5 // pred_fallthru
        _
    $region6: #{tpu_custom_call.1} parent=1 // loop_footer
      %s22 = sadd.s32 1, %s18
    $region7: #{tpu_custom_call.1} parent=1 // loop_footer_branch
      %17 = sbr.rel target = $region3
    $region8: #{tpu_custom_call.1} parent=1 // loop_exit
      _
    %1818 = vsyncpa [#allocation5], 1
    %s1819 = scalar_lea.sflag [#allocation5], 1
    %1820 = vsyncpa %s1819, 1
    %1821 = vsyncpa [#allocation6], 1
    %s1822 = scalar_lea.sflag [#allocation6], 1
    %1823 = vsyncpa %s1822, 1

</llo_original>
